<compile_context>
chip_gen: v7x
topology: tpu7x:2x2x1
jax: 0.10.0
libtpu: 0.0.40
codegen_flags: <defaults>
</compile_context>

<pallas_src>
import functools

import jax
import jax.numpy as jnp
from jax import lax
from jax.experimental import pallas as pl
from jax.experimental.pallas import tpu as pltpu

MIN_IOU = 0.5
MAX_IOU = 1.0
TAO = 1.0            # ContrastLoss default
EPS = 1e-8

# output row (b, 0, :) lane assignment:
#   lane 0: per-batch contrast term (-log(num/(den+eps)) if valid else 0)
#   lane 1: per-batch validity flag (has both positives and negatives)
#   lane 2: loss_bce      (row 0 only)
#   lane 3: loss_td       (row 0 only)
#   lane 4: loss_refine   (row 0 only)
#   lane 5: loss_offset   (row 0 only)


def _bce_with_logits(x, y):
    # numerically stable BCE-with-logits
    return jnp.maximum(x, 0.0) - x * y + jnp.log(1.0 + jnp.exp(-jnp.abs(x)))


def _fused_loss_kernel(scores_ref, iou_ref, mask_ref, td_ref, sed_ref,
                       rlogit_ref, riou_ref, offp_ref, offg_ref,
                       q_ref, v_ref, pos_ref, neg_ref,
                       out_ref,
                       s_pos, s_neg, s_pc, s_nc,
                       *, min_iou, max_iou, tao):
    b = pl.program_id(0)
    k = pl.program_id(1)
    k_last = k == pl.num_programs(1) - 1
    lane = lax.broadcasted_iota(jnp.int32, (8, 128), 1)

    # -------- contrast loss: init per-batch accumulators --------
    @pl.when(k == 0)
    def _():
        s_pos[...] = jnp.zeros_like(s_pos)
        s_neg[...] = jnp.zeros_like(s_neg)
        s_pc[...] = jnp.zeros_like(s_pc)
        s_nc[...] = jnp.zeros_like(s_nc)

    # -------- contrast loss: accumulate this N-tile --------
    q = q_ref[0].astype(jnp.float32)                       # (1, H)
    v = v_ref[0].astype(jnp.float32)                       # (TN, H)
    pm = pos_ref[0].astype(jnp.float32)                    # (TN, 1)
    nm = neg_ref[0].astype(jnp.float32)                    # (TN, 1)

    qn = jnp.sqrt(jnp.sum(q * q, axis=(0, 1), keepdims=True))       # (1, 1)
    q_norm = q / (qn + EPS)                                          # (1, H)
    dots = jnp.sum(v * q_norm, axis=-1, keepdims=True)               # (TN, 1)
    vn = jnp.sqrt(jnp.sum(v * v, axis=-1, keepdims=True))            # (TN, 1)
    # reference normalizes tmap rows twice: v/||v||, then /(||v/||v|| || + eps)
    denom_v = vn * (1.0 + EPS)
    sims = dots / jnp.where(denom_v > 0.0, denom_v, 1.0)
    e = jnp.exp(sims / tao)
    s_pos[...] += jnp.sum(e * pm, axis=(0, 1), keepdims=True)
    s_neg[...] += jnp.sum(e * nm, axis=(0, 1), keepdims=True)
    s_pc[...] += jnp.sum(pm, axis=(0, 1), keepdims=True)
    s_nc[...] += jnp.sum(nm, axis=(0, 1), keepdims=True)

    # -------- contrast loss: finalize this batch row --------
    @pl.when(k_last)
    def _():
        num = s_pos[...]
        den = num + s_neg[...]
        valid = jnp.logical_and(s_pc[...] > 0.0, s_nc[...] > 0.0)    # (1, 1)
        per_b = jnp.where(valid, -jnp.log(num / (den + EPS)), 0.0)
        valid_f = valid.astype(jnp.float32)
        blk = jnp.zeros((8, 128), jnp.float32)
        blk = jnp.where(lane == 0, per_b, blk)
        blk = jnp.where(lane == 1, valid_f, blk)
        out_ref[...] = blk.reshape(1, 8, 128)

    # -------- small losses: computed once, stored in batch row 0 --------
    @pl.when(jnp.logical_and(k_last, b == 0))
    def _():
        inv_span = 1.0 / (max_iou - min_iou)

        # loss_bce: masked BCE over the 2D score map
        x = scores_ref[...].astype(jnp.float32)                      # (B, N)
        y = jnp.clip((iou_ref[...].astype(jnp.float32) - min_iou) * inv_span,
                     0.0, 1.0)
        m = mask_ref[...].astype(jnp.float32)
        bce = _bce_with_logits(x, y)
        num_b = jnp.sum(bce * m, axis=(0, 1), keepdims=True)
        den_b = jnp.sum(m, axis=(0, 1), keepdims=True)
        loss_bce = num_b / jnp.maximum(den_b, 1.0)                   # den>=1 if any mask

        # loss_td: temporal-difference loss (log-softmax form)
        td = td_ref[...].astype(jnp.float32)                         # (B, S)
        tmask = jnp.sum(sed_ref[...].astype(jnp.float32), axis=1)    # (B, S)
        mx = jnp.max(td, axis=-1, keepdims=True)
        lse = mx + jnp.log(jnp.sum(jnp.exp(td - mx), axis=-1, keepdims=True))
        log_sm = td - lse
        numer = jnp.sum(tmask * log_sm, axis=-1, keepdims=True)
        denom = jnp.sum(tmask, axis=-1, keepdims=True)
        loss_td = jnp.mean(-numer / (denom + EPS), axis=(0, 1), keepdims=True)

        # loss_refine: BCE on gathered (scaled+clamped in-kernel) ious
        xr = rlogit_ref[...].astype(jnp.float32)                     # (B, P)
        yr = jnp.clip((riou_ref[...].astype(jnp.float32) - min_iou) * inv_span,
                      0.0, 1.0)
        bce_r = _bce_with_logits(xr, yr)
        loss_refine = (jnp.sum(bce_r, axis=(0, 1), keepdims=True)
                       / float(xr.shape[0] * xr.shape[1]))

        # loss_offset: SmoothL1(col0) + SmoothL1(col1) == sum / (B*P)
        d = offp_ref[...].astype(jnp.float32) - offg_ref[...].astype(jnp.float32)
        a = jnp.abs(d)
        sl1 = jnp.where(a < 1.0, 0.5 * d * d, a - 0.5)
        loss_offset = (jnp.sum(sl1, axis=(0, 1), keepdims=True)
                       / float(d.shape[1]))

        blk = out_ref[...].reshape(8, 128)
        blk = jnp.where(lane == 2, loss_bce, blk)
        blk = jnp.where(lane == 3, loss_td, blk)
        blk = jnp.where(lane == 4, loss_refine, blk)
        blk = jnp.where(lane == 5, loss_offset, blk)
        out_ref[...] = blk.reshape(1, 8, 128)


def _round_up(x, m):
    return ((x + m - 1) // m) * m


def main_loss(out_feature, data, td, *, min_iou=MIN_IOU, max_iou=MAX_IOU, tao=TAO):
    scores2d = out_feature['tmap']                     # (B, 1, S, S)
    mask2d = out_feature['map2d_mask']                 # (B, S, S) bool
    map2d_proj = out_feature['map2d_proj']             # (B, S, S, H)
    sen_proj = out_feature['sen_proj']                 # (B, H)
    pred_s_e_round = out_feature['coarse_pred_round']  # (B, P, 2) int32
    final_pred = out_feature['final_pred']             # (B, P, 1)
    offset_pred = out_feature['offset']                # (B, P, 2)
    offset_gt = out_feature['offset_gt']               # (B, P, 2)
    ious2d = data['iou2d']                             # (B, S, S)
    s_e_distribution = data['s_e_distribution']        # (B, 2, S)
    mask2d_contrast = data['mask2d_contrast']          # (B, 2, S, S) bool

    B, S, _ = ious2d.shape
    H = sen_proj.shape[-1]
    P = pred_s_e_round.shape[1]
    N = S * S

    # ---- flat, lane-dense views for the dense (B, N) losses ----
    scores_flat = scores2d.reshape(B, N)
    iou_flat = ious2d.reshape(B, N)
    mask_flat = mask2d.reshape(B, N).astype(jnp.float32)

    # ---- contrast inputs: tile N, keep hidden dim in its native minor position ----
    N128 = _round_up(N, 128)
    TN = min(N128, 1024)
    KN = -(-N128 // TN)
    N_pad = KN * TN

    pos_m = jnp.logical_and(mask2d, mask2d_contrast[:, 0]).reshape(B, N)
    neg_m = jnp.logical_and(mask2d, mask2d_contrast[:, 1]).reshape(B, N)
    pos_m = pos_m.astype(jnp.float32)
    neg_m = neg_m.astype(jnp.float32)
    v = map2d_proj.reshape(B, N, H)
    if N_pad != N:
        pad = N_pad - N
        v = jnp.pad(v, ((0, 0), (0, pad), (0, 0)))
        pos_m = jnp.pad(pos_m, ((0, 0), (0, pad)))
        neg_m = jnp.pad(neg_m, ((0, 0), (0, pad)))
    pos_m = pos_m.reshape(B, N_pad, 1)
    neg_m = neg_m.reshape(B, N_pad, 1)
    q3 = sen_proj.reshape(B, 1, H)

    # ---- refine: tiny data-dependent (start, end) gather stays in glue ----
    # TODO(synk): could be folded in-kernel via SMEM indices + one-hot reduce, but the
    # (B, P) gather is a single tiny XLA op; kept here for lowering robustness.
    start = jnp.clip(pred_s_e_round[:, :, 0], 0, S - 1)
    end = pred_s_e_round[:, :, 1] - 1
    end = jnp.where(end < 0, end + S, end)               # PyTorch negative-index wrap
    end = jnp.clip(end, 0, S - 1)
    riou = ious2d[jnp.arange(B)[:, None], start, end]    # (B, P) raw ious
    rlogits = final_pred.reshape(B, P)

    # ---- offsets: long axis last ----
    offp = offset_pred.reshape(-1, 2).T                  # (2, B*P)
    offg = offset_gt.reshape(-1, 2).T

    kernel = functools.partial(_fused_loss_kernel,
                               min_iou=float(min_iou), max_iou=float(max_iou),
                               tao=float(tao))

    def const_spec(shape):
        return pl.BlockSpec(tuple(shape), lambda b, k, _s=len(shape): (0,) * _s)

    grid_spec = pltpu.PrefetchScalarGridSpec(
        num_scalar_prefetch=0,
        grid=(B, KN),
        in_specs=[
            const_spec(scores_flat.shape),                       # (B, N)
            const_spec(iou_flat.shape),                          # (B, N)
            const_spec(mask_flat.shape),                         # (B, N)
            const_spec(td.shape),                                # (B, S)
            const_spec(s_e_distribution.shape),                  # (B, 2, S)
            const_spec(rlogits.shape),                           # (B, P)
            const_spec(riou.shape),                              # (B, P)
            const_spec(offp.shape),                              # (2, B*P)
            const_spec(offg.shape),                              # (2, B*P)
            pl.BlockSpec((1, 1, H), lambda b, k: (b, 0, 0)),     # sen_proj
            pl.BlockSpec((1, TN, H), lambda b, k: (b, k, 0)),    # map2d_proj tiles
            pl.BlockSpec((1, TN, 1), lambda b, k: (b, k, 0)),    # pos mask tiles
            pl.BlockSpec((1, TN, 1), lambda b, k: (b, k, 0)),    # neg mask tiles
        ],
        out_specs=pl.BlockSpec((1, 8, 128), lambda b, k: (b, 0, 0)),
        scratch_shapes=[pltpu.VMEM((1, 1), jnp.float32) for _ in range(4)],
    )

    res = pl.pallas_call(
        kernel,
        out_shape=jax.ShapeDtypeStruct((B, 8, 128), jnp.float32),
        grid_spec=grid_spec,
        compiler_params=pltpu.CompilerParams(
            dimension_semantics=("parallel", "arbitrary"),
            vmem_limit_bytes=32 * 1024 * 1024),
    )(scores_flat, iou_flat, mask_flat, td, s_e_distribution,
      rlogits, riou, offp, offg, q3, v, pos_m, neg_m)

    per_b = res[:, 0, 0]
    valid = res[:, 0, 1]
    loss_contrast = jnp.sum(per_b) / jnp.maximum(jnp.sum(valid), 1.0)

    return {'loss_bce': res[0, 0, 2],
            'loss_refine': res[0, 0, 4],
            'loss_td': res[0, 0, 3],
            'loss_contrast': loss_contrast,
            'loss_offset': res[0, 0, 5]}


# ----------------------------------------------------------------------------
# Example run
# ----------------------------------------------------------------------------
if __name__ == "__main__":
    B, S, H, P = 2, 16, 32, 4
    key = jax.random.PRNGKey(0)
    ks = jax.random.split(key, 12)

    # valid upper-triangular 2D temporal map positions (start <= end)
    tri = jnp.triu(jnp.ones((S, S), dtype=bool))
    mask2d = jnp.broadcast_to(tri, (B, S, S))

    scores2d = jax.random.normal(ks[0], (B, 1, S, S), jnp.float32)
    ious2d = jax.random.uniform(ks[1], (B, S, S), jnp.float32)
    s_e_distribution = jax.random.uniform(ks[2], (B, 2, S), jnp.float32)
    td = jax.random.normal(ks[3], (B, S), jnp.float32)
    mask2d_contrast = jax.random.uniform(ks[4], (B, 2, S, S)) > 0.5
    map2d_proj = jax.random.normal(ks[5], (B, S, S, H), jnp.float32)
    sen_proj = jax.random.normal(ks[6], (B, H), jnp.float32)

    starts = jax.random.randint(ks[7], (B, P), 0, S // 2)
    lengths = jax.random.randint(ks[8], (B, P), 1, S // 2)
    pred_s_e_round = jnp.stack([starts, starts + lengths], axis=-1).astype(jnp.int32)

    final_pred = jax.random.normal(ks[9], (B, P, 1), jnp.float32)
    offset_pred = jax.random.normal(ks[10], (B, P, 2), jnp.float32)
    offset_gt = jax.random.normal(ks[11], (B, P, 2), jnp.float32)

    out_feature = {'tmap': scores2d,
                   'map2d_mask': mask2d,
                   'map2d_proj': map2d_proj,
                   'sen_proj': sen_proj,
                   'coarse_pred_round': pred_s_e_round,
                   'final_pred': final_pred,
                   'offset': offset_pred,
                   'offset_gt': offset_gt}
    data = {'iou2d': ious2d,
            's_e_distribution': s_e_distribution,
            'mask2d_contrast': mask2d_contrast}

    loss_fn = jax.jit(lambda of, d, t: main_loss(of, d, t))
    losses = loss_fn(out_feature, data, td)
    losses = jax.tree_util.tree_map(jax.block_until_ready, losses)
    print("KERNEL_OK")
</pallas_src>

<mosaic_0001>
module attributes {stable_mosaic.version = 11 : i64} {
  func.func @_fused_loss_kernel(%arg0: i32, %arg1: i32, %arg2: memref<2x256xf32, #tpu.memory_space<vmem>>, %arg3: memref<2x256xf32, #tpu.memory_space<vmem>>, %arg4: memref<2x256xf32, #tpu.memory_space<vmem>>, %arg5: memref<2x16xf32, #tpu.memory_space<vmem>>, %arg6: memref<2x2x16xf32, #tpu.memory_space<vmem>>, %arg7: memref<2x4xf32, #tpu.memory_space<vmem>>, %arg8: memref<2x4xf32, #tpu.memory_space<vmem>>, %arg9: memref<2x8xf32, #tpu.memory_space<vmem>>, %arg10: memref<2x8xf32, #tpu.memory_space<vmem>>, %arg11: memref<1x1x32xf32, #tpu.memory_space<vmem>>, %arg12: memref<1x256x32xf32, #tpu.memory_space<vmem>>, %arg13: memref<1x256x1xf32, #tpu.memory_space<vmem>>, %arg14: memref<1x256x1xf32, #tpu.memory_space<vmem>>, %arg15: memref<1x8x128xf32, #tpu.memory_space<vmem>>, %arg16: memref<1x1xf32, #tpu.memory_space<vmem>>, %arg17: memref<1x1xf32, #tpu.memory_space<vmem>>, %arg18: memref<1x1xf32, #tpu.memory_space<vmem>>, %arg19: memref<1x1xf32, #tpu.memory_space<vmem>>) attributes {dimension_semantics = [#tpu.dimension_semantics<parallel>, #tpu.dimension_semantics<arbitrary>], iteration_bounds = array<i64: 2, 1>, scalar_prefetch = 0 : i64, scratch_operands = 4 : i64, tpu.core_type = #tpu.core_type<tc>, window_params = [{pipeline_mode = #tpu.pipeline_mode<synchronous>, transform_indices = @transform_0, window_bounds = array<i64: 2, 256>}, {pipeline_mode = #tpu.pipeline_mode<synchronous>, transform_indices = @transform_1, window_bounds = array<i64: 2, 256>}, {pipeline_mode = #tpu.pipeline_mode<synchronous>, transform_indices = @transform_2, window_bounds = array<i64: 2, 256>}, {pipeline_mode = #tpu.pipeline_mode<synchronous>, transform_indices = @transform_3, window_bounds = array<i64: 2, 16>}, {pipeline_mode = #tpu.pipeline_mode<synchronous>, transform_indices = @transform_4, window_bounds = array<i64: 2, 2, 16>}, {pipeline_mode = #tpu.pipeline_mode<synchronous>, transform_indices = @transform_5, window_bounds = array<i64: 2, 4>}, {pipeline_mode = #tpu.pipeline_mode<synchronous>, transform_indices = @transform_6, window_bounds = array<i64: 2, 4>}, {pipeline_mode = #tpu.pipeline_mode<synchronous>, transform_indices = @transform_7, window_bounds = array<i64: 2, 8>}, {pipeline_mode = #tpu.pipeline_mode<synchronous>, transform_indices = @transform_8, window_bounds = array<i64: 2, 8>}, {transform_indices = @transform_9, window_bounds = array<i64: 1, 1, 32>}, {transform_indices = @transform_10, window_bounds = array<i64: 1, 256, 32>}, {transform_indices = @transform_11, window_bounds = array<i64: 1, 256, 1>}, {transform_indices = @transform_12, window_bounds = array<i64: 1, 256, 1>}, {transform_indices = @transform_13, window_bounds = array<i64: 1, 8, 128>}]} {
    %c0_i32 = arith.constant 0 : i32
    %0 = arith.cmpi eq, %arg1, %c0_i32 : i32
    %1 = tpu.iota {dimensions = array<i32: 1>} : vector<8x128xi32>
    %c0_i32_0 = arith.constant 0 : i32
    %2 = arith.cmpi eq, %arg1, %c0_i32_0 : i32
    %3 = arith.extui %2 : i1 to i32
    %c0_i32_1 = arith.constant 0 : i32
    %4 = arith.cmpi ne, %3, %c0_i32_1 : i32
    scf.if %4 {
      %cst_43 = arith.constant 0.000000e+00 : f32
      %82 = vector.broadcast %cst_43 : f32 to vector<1x1xf32>
      %c0_44 = arith.constant 0 : index
      %c0_45 = arith.constant 0 : index
      %83 = vector.load %arg16[%c0_44, %c0_45] : memref<1x1xf32, #tpu.memory_space<vmem>>, vector<1x1xf32>
      tpu.vector_store %arg16[%c0_44, %c0_45], %82 {strides = array<i32>} : memref<1x1xf32, #tpu.memory_space<vmem>>, vector<1x1xf32>,
      %cst_46 = arith.constant 0.000000e+00 : f32
      %84 = vector.broadcast %cst_46 : f32 to vector<1x1xf32>
      %c0_47 = arith.constant 0 : index
      %c0_48 = arith.constant 0 : index
      %85 = vector.load %arg17[%c0_47, %c0_48] : memref<1x1xf32, #tpu.memory_space<vmem>>, vector<1x1xf32>
      tpu.vector_store %arg17[%c0_47, %c0_48], %84 {strides = array<i32>} : memref<1x1xf32, #tpu.memory_space<vmem>>, vector<1x1xf32>,
      %cst_49 = arith.constant 0.000000e+00 : f32
      %86 = vector.broadcast %cst_49 : f32 to vector<1x1xf32>
      %c0_50 = arith.constant 0 : index
      %c0_51 = arith.constant 0 : index
      %87 = vector.load %arg18[%c0_50, %c0_51] : memref<1x1xf32, #tpu.memory_space<vmem>>, vector<1x1xf32>
      tpu.vector_store %arg18[%c0_50, %c0_51], %86 {strides = array<i32>} : memref<1x1xf32, #tpu.memory_space<vmem>>, vector<1x1xf32>,
      %cst_52 = arith.constant 0.000000e+00 : f32
      %88 = vector.broadcast %cst_52 : f32 to vector<1x1xf32>
      %c0_53 = arith.constant 0 : index
      %c0_54 = arith.constant 0 : index
      %89 = vector.load %arg19[%c0_53, %c0_54] : memref<1x1xf32, #tpu.memory_space<vmem>>, vector<1x1xf32>
      tpu.vector_store %arg19[%c0_53, %c0_54], %88 {strides = array<i32>} : memref<1x1xf32, #tpu.memory_space<vmem>>, vector<1x1xf32>,
    } else {
    }
    %c0 = arith.constant 0 : index
    %c0_2 = arith.constant 0 : index
    %c0_3 = arith.constant 0 : index
    %5 = vector.load %arg11[%c0, %c0_2, %c0_3] : memref<1x1x32xf32, #tpu.memory_space<vmem>>, vector<1x1x32xf32>
    %6 = vector.shape_cast %5 : vector<1x1x32xf32> to vector<1x32xf32>
    %c0_4 = arith.constant 0 : index
    %c0_5 = arith.constant 0 : index
    %c0_6 = arith.constant 0 : index
    %7 = vector.load %arg12[%c0_4, %c0_5, %c0_6] : memref<1x256x32xf32, #tpu.memory_space<vmem>>, vector<1x256x32xf32>
    %8 = vector.shape_cast %7 : vector<1x256x32xf32> to vector<256x32xf32>
    %c0_7 = arith.constant 0 : index
    %c0_8 = arith.constant 0 : index
    %c0_9 = arith.constant 0 : index
    %9 = vector.load %arg13[%c0_7, %c0_8, %c0_9] : memref<1x256x1xf32, #tpu.memory_space<vmem>>, vector<1x256x1xf32>
    %10 = vector.shape_cast %9 : vector<1x256x1xf32> to vector<256x1xf32>
    %c0_10 = arith.constant 0 : index
    %c0_11 = arith.constant 0 : index
    %c0_12 = arith.constant 0 : index
    %11 = vector.load %arg14[%c0_10, %c0_11, %c0_12] : memref<1x256x1xf32, #tpu.memory_space<vmem>>, vector<1x256x1xf32>
    %12 = vector.shape_cast %11 : vector<1x256x1xf32> to vector<256x1xf32>
    %13 = arith.mulf %6, %6 : vector<1x32xf32>
    %14 = vector.shape_cast %13 : vector<1x32xf32> to vector<1x1x32xf32>
    %cst = arith.constant dense<0.000000e+00> : vector<1xf32>
    %15 = vector.multi_reduction <add>, %14, %cst [1, 2] : vector<1x1x32xf32> to vector<1xf32>
    %16 = vector.shape_cast %15 : vector<1xf32> to vector<1x1x1xf32>
    %17 = vector.extract %16[0, 0, 0] : f32 from vector<1x1x1xf32>
    %18 = vector.broadcast %17 : f32 to vector<1x1xf32>
    %19 = math.sqrt %18 : vector<1x1xf32>
    %cst_13 = arith.constant 9.99999993E-9 : f32
    %20 = vector.broadcast %cst_13 : f32 to vector<1x1xf32>
    %21 = arith.addf %19, %20 : vector<1x1xf32>
    %22 = vector.broadcast %21 : vector<1x1xf32> to vector<1x32xf32>
    %23 = arith.divf %6, %22 : vector<1x32xf32>
    %24 = vector.broadcast %23 : vector<1x32xf32> to vector<256x32xf32>
    %25 = arith.mulf %8, %24 : vector<256x32xf32>
    %cst_14 = arith.constant dense<0.000000e+00> : vector<256xf32>
    %26 = vector.multi_reduction <add>, %25, %cst_14 [1] : vector<256x32xf32> to vector<256xf32>
    %27 = vector.shape_cast %26 : vector<256xf32> to vector<256x1xf32>
    %28 = arith.mulf %8, %8 : vector<256x32xf32>
    %cst_15 = arith.constant dense<0.000000e+00> : vector<256xf32>
    %29 = vector.multi_reduction <add>, %28, %cst_15 [1] : vector<256x32xf32> to vector<256xf32>
    %30 = vector.shape_cast %29 : vector<256xf32> to vector<256x1xf32>
    %31 = math.sqrt %30 : vector<256x1xf32>
    %cst_16 = arith.constant 1.000000e+00 : f32
    %32 = vector.broadcast %cst_16 : f32 to vector<256x1xf32>
    %33 = arith.mulf %31, %32 : vector<256x1xf32>
    %cst_17 = arith.constant 0.000000e+00 : f32
    %34 = vector.broadcast %cst_17 : f32 to vector<256x1xf32>
    %35 = arith.cmpf ogt, %33, %34 : vector<256x1xf32>
    %cst_18 = arith.constant 1.000000e+00 : f32
    %36 = vector.broadcast %cst_18 : f32 to vector<256x1xf32>
    %37 = arith.select %35, %33, %36 : vector<256x1xi1>, vector<256x1xf32>
    %38 = arith.divf %27, %37 : vector<256x1xf32>
    %cst_19 = arith.constant 1.000000e+00 : f32
    %39 = vector.broadcast %cst_19 : f32 to vector<256x1xf32>
    %40 = arith.divf %38, %39 : vector<256x1xf32>
    %41 = math.exp %40 : vector<256x1xf32>
    %c0_20 = arith.constant 0 : index
    %c0_21 = arith.constant 0 : index
    %42 = vector.load %arg16[%c0_20, %c0_21] : memref<1x1xf32, #tpu.memory_space<vmem>>, vector<1x1xf32>
    %43 = arith.mulf %41, %10 : vector<256x1xf32>
    %44 = vector.shape_cast %43 : vector<256x1xf32> to vector<1x256x1xf32>
    %cst_22 = arith.constant dense<0.000000e+00> : vector<1xf32>
    %45 = vector.multi_reduction <add>, %44, %cst_22 [1, 2] : vector<1x256x1xf32> to vector<1xf32>
    %46 = vector.shape_cast %45 : vector<1xf32> to vector<1x1x1xf32>
    %47 = vector.extract %46[0, 0, 0] : f32 from vector<1x1x1xf32>
    %48 = vector.broadcast %47 : f32 to vector<1x1xf32>
    %49 = arith.addf %42, %48 : vector<1x1xf32>
    %c0_23 = arith.constant 0 : index
    %c0_24 = arith.constant 0 : index
    %50 = vector.load %arg16[%c0_23, %c0_24] : memref<1x1xf32, #tpu.memory_space<vmem>>, vector<1x1xf32>
    tpu.vector_store %arg16[%c0_23, %c0_24], %49 {strides = array<i32>} : memref<1x1xf32, #tpu.memory_space<vmem>>, vector<1x1xf32>,
    %c0_25 = arith.constant 0 : index
    %c0_26 = arith.constant 0 : index
    %51 = vector.load %arg17[%c0_25, %c0_26] : memref<1x1xf32, #tpu.memory_space<vmem>>, vector<1x1xf32>
    %52 = arith.mulf %41, %12 : vector<256x1xf32>
    %53 = vector.shape_cast %52 : vector<256x1xf32> to vector<1x256x1xf32>
    %cst_27 = arith.constant dense<0.000000e+00> : vector<1xf32>
    %54 = vector.multi_reduction <add>, %53, %cst_27 [1, 2] : vector<1x256x1xf32> to vector<1xf32>
    %55 = vector.shape_cast %54 : vector<1xf32> to vector<1x1x1xf32>
    %56 = vector.extract %55[0, 0, 0] : f32 from vector<1x1x1xf32>
    %57 = vector.broadcast %56 : f32 to vector<1x1xf32>
    %58 = arith.addf %51, %57 : vector<1x1xf32>
    %c0_28 = arith.constant 0 : index
    %c0_29 = arith.constant 0 : index
    %59 = vector.load %arg17[%c0_28, %c0_29] : memref<1x1xf32, #tpu.memory_space<vmem>>, vector<1x1xf32>
    tpu.vector_store %arg17[%c0_28, %c0_29], %58 {strides = array<i32>} : memref<1x1xf32, #tpu.memory_space<vmem>>, vector<1x1xf32>,
    %c0_30 = arith.constant 0 : index
    %c0_31 = arith.constant 0 : index
    %60 = vector.load %arg18[%c0_30, %c0_31] : memref<1x1xf32, #tpu.memory_space<vmem>>, vector<1x1xf32>
    %61 = vector.shape_cast %10 : vector<256x1xf32> to vector<1x256x1xf32>
    %cst_32 = arith.constant dense<0.000000e+00> : vector<1xf32>
    %62 = vector.multi_reduction <add>, %61, %cst_32 [1, 2] : vector<1x256x1xf32> to vector<1xf32>
    %63 = vector.shape_cast %62 : vector<1xf32> to vector<1x1x1xf32>
    %64 = vector.extract %63[0, 0, 0] : f32 from vector<1x1x1xf32>
    %65 = vector.broadcast %64 : f32 to vector<1x1xf32>
    %66 = arith.addf %60, %65 : vector<1x1xf32>
    %c0_33 = arith.constant 0 : index
    %c0_34 = arith.constant 0 : index
    %67 = vector.load %arg18[%c0_33, %c0_34] : memref<1x1xf32, #tpu.memory_space<vmem>>, vector<1x1xf32>
    tpu.vector_store %arg18[%c0_33, %c0_34], %66 {strides = array<i32>} : memref<1x1xf32, #tpu.memory_space<vmem>>, vector<1x1xf32>,
    %c0_35 = arith.constant 0 : index
    %c0_36 = arith.constant 0 : index
    %68 = vector.load %arg19[%c0_35, %c0_36] : memref<1x1xf32, #tpu.memory_space<vmem>>, vector<1x1xf32>
    %69 = vector.shape_cast %12 : vector<256x1xf32> to vector<1x256x1xf32>
    %cst_37 = arith.constant dense<0.000000e+00> : vector<1xf32>
    %70 = vector.multi_reduction <add>, %69, %cst_37 [1, 2] : vector<1x256x1xf32> to vector<1xf32>
    %71 = vector.shape_cast %70 : vector<1xf32> to vector<1x1x1xf32>
    %72 = vector.extract %71[0, 0, 0] : f32 from vector<1x1x1xf32>
    %73 = vector.broadcast %72 : f32 to vector<1x1xf32>
    %74 = arith.addf %68, %73 : vector<1x1xf32>
    %c0_38 = arith.constant 0 : index
    %c0_39 = arith.constant 0 : index
    %75 = vector.load %arg19[%c0_38, %c0_39] : memref<1x1xf32, #tpu.memory_space<vmem>>, vector<1x1xf32>
    tpu.vector_store %arg19[%c0_38, %c0_39], %74 {strides = array<i32>} : memref<1x1xf32, #tpu.memory_space<vmem>>, vector<1x1xf32>,
    %76 = arith.extui %0 : i1 to i32
    %c0_i32_40 = arith.constant 0 : i32
    %77 = arith.cmpi ne, %76, %c0_i32_40 : i32
    scf.if %77 {
      %c0_43 = arith.constant 0 : index
      %c0_44 = arith.constant 0 : index
      %82 = vector.load %arg16[%c0_43, %c0_44] : memref<1x1xf32, #tpu.memory_space<vmem>>, vector<1x1xf32>
      %c0_45 = arith.constant 0 : index
      %c0_46 = arith.constant 0 : index
      %83 = vector.load %arg17[%c0_45, %c0_46] : memref<1x1xf32, #tpu.memory_space<vmem>>, vector<1x1xf32>
      %84 = arith.addf %82, %83 : vector<1x1xf32>
      %c0_47 = arith.constant 0 : index
      %c0_48 = arith.constant 0 : index
      %85 = vector.load %arg18[%c0_47, %c0_48] : memref<1x1xf32, #tpu.memory_space<vmem>>, vector<1x1xf32>
      %cst_49 = arith.constant 0.000000e+00 : f32
      %86 = vector.broadcast %cst_49 : f32 to vector<1x1xf32>
      %87 = arith.cmpf ogt, %85, %86 : vector<1x1xf32>
      %c0_50 = arith.constant 0 : index
      %c0_51 = arith.constant 0 : index
      %88 = vector.load %arg19[%c0_50, %c0_51] : memref<1x1xf32, #tpu.memory_space<vmem>>, vector<1x1xf32>
      %cst_52 = arith.constant 0.000000e+00 : f32
      %89 = vector.broadcast %cst_52 : f32 to vector<1x1xf32>
      %90 = arith.cmpf ogt, %88, %89 : vector<1x1xf32>
      %91 = arith.andi %87, %90 : vector<1x1xi1>
      %cst_53 = arith.constant 9.99999993E-9 : f32
      %92 = vector.broadcast %cst_53 : f32 to vector<1x1xf32>
      %93 = arith.addf %84, %92 : vector<1x1xf32>
      %94 = arith.divf %82, %93 : vector<1x1xf32>
      %95 = math.log %94 : vector<1x1xf32>
      %cst_54 = arith.constant 0.000000e+00 : f32
      %96 = vector.broadcast %cst_54 : f32 to vector<1x1xf32>
      %97 = arith.subf %96, %95 : vector<1x1xf32>
      %cst_55 = arith.constant 0.000000e+00 : f32
      %98 = vector.broadcast %cst_55 : f32 to vector<1x1xf32>
      %99 = arith.select %91, %97, %98 : vector<1x1xi1>, vector<1x1xf32>
      %100 = arith.extui %91 : vector<1x1xi1> to vector<1x1xi32>
      %101 = arith.sitofp %100 : vector<1x1xi32> to vector<1x1xf32>
      %cst_56 = arith.constant 0.000000e+00 : f32
      %102 = vector.broadcast %cst_56 : f32 to vector<8x128xf32>
      %c0_i32_57 = arith.constant 0 : i32
      %103 = vector.broadcast %c0_i32_57 : i32 to vector<8x128xi32>
      %104 = arith.cmpi eq, %1, %103 : vector<8x128xi32>
      %105 = vector.shape_cast %99 : vector<1x1xf32> to vector<1x1xf32>
      %106 = vector.broadcast %105 : vector<1x1xf32> to vector<8x128xf32>
      %107 = arith.select %104, %106, %102 : vector<8x128xi1>, vector<8x128xf32>
      %c1_i32 = arith.constant 1 : i32
      %108 = vector.broadcast %c1_i32 : i32 to vector<8x128xi32>
      %109 = arith.cmpi eq, %1, %108 : vector<8x128xi32>
      %110 = vector.shape_cast %101 : vector<1x1xf32> to vector<1x1xf32>
      %111 = vector.broadcast %110 : vector<1x1xf32> to vector<8x128xf32>
      %112 = arith.select %109, %111, %107 : vector<8x128xi1>, vector<8x128xf32>
      %113 = vector.shape_cast %112 : vector<8x128xf32> to vector<1x8x128xf32>
      %c0_58 = arith.constant 0 : index
      %c0_59 = arith.constant 0 : index
      %c0_60 = arith.constant 0 : index
      %114 = vector.load %arg15[%c0_58, %c0_59, %c0_60] : memref<1x8x128xf32, #tpu.memory_space<vmem>>, vector<1x8x128xf32>
      tpu.vector_store %arg15[%c0_58, %c0_59, %c0_60], %113 {strides = array<i32>} : memref<1x8x128xf32, #tpu.memory_space<vmem>>, vector<1x8x128xf32>,
    } else {
    }
    %c0_i32_41 = arith.constant 0 : i32
    %78 = arith.cmpi eq, %arg0, %c0_i32_41 : i32
    %79 = arith.andi %0, %78 : i1
    %80 = arith.extui %79 : i1 to i32
    %c0_i32_42 = arith.constant 0 : i32
    %81 = arith.cmpi ne, %80, %c0_i32_42 : i32
    scf.if %81 {
      %c0_43 = arith.constant 0 : index
      %c0_44 = arith.constant 0 : index
      %82 = vector.load %arg2[%c0_43, %c0_44] : memref<2x256xf32, #tpu.memory_space<vmem>>, vector<2x256xf32>
      %c0_45 = arith.constant 0 : index
      %c0_46 = arith.constant 0 : index
      %83 = vector.load %arg3[%c0_45, %c0_46] : memref<2x256xf32, #tpu.memory_space<vmem>>, vector<2x256xf32>
      %cst_47 = arith.constant 5.000000e-01 : f32
      %84 = vector.broadcast %cst_47 : f32 to vector<2x256xf32>
      %85 = arith.subf %83, %84 : vector<2x256xf32>
      %cst_48 = arith.constant 2.000000e+00 : f32
      %86 = vector.broadcast %cst_48 : f32 to vector<2x256xf32>
      %87 = arith.mulf %85, %86 : vector<2x256xf32>
      %cst_49 = arith.constant 0.000000e+00 : f32
      %cst_50 = arith.constant 1.000000e+00 : f32
      %88 = vector.broadcast %cst_49 : f32 to vector<2x256xf32>
      %89 = arith.maximumf %88, %87 : vector<2x256xf32>
      %90 = vector.broadcast %cst_50 : f32 to vector<2x256xf32>
      %91 = arith.minimumf %90, %89 : vector<2x256xf32>
      %c0_51 = arith.constant 0 : index
      %c0_52 = arith.constant 0 : index
      %92 = vector.load %arg4[%c0_51, %c0_52] : memref<2x256xf32, #tpu.memory_space<vmem>>, vector<2x256xf32>
      %cst_53 = arith.constant 0.000000e+00 : f32
      %93 = vector.broadcast %cst_53 : f32 to vector<2x256xf32>
      %94 = arith.maximumf %82, %93 : vector<2x256xf32>
      %95 = arith.mulf %82, %91 : vector<2x256xf32>
      %96 = arith.subf %94, %95 : vector<2x256xf32>
      %97 = math.absf %82 : vector<2x256xf32>
      %cst_54 = arith.constant 0.000000e+00 : f32
      %98 = vector.broadcast %cst_54 : f32 to vector<2x256xf32>
      %99 = arith.subf %98, %97 : vector<2x256xf32>
      %100 = math.exp %99 : vector<2x256xf32>
      %cst_55 = arith.constant 1.000000e+00 : f32
      %101 = vector.broadcast %cst_55 : f32 to vector<2x256xf32>
      %102 = arith.addf %101, %100 : vector<2x256xf32>
      %103 = math.log %102 : vector<2x256xf32>
      %104 = arith.addf %96, %103 : vector<2x256xf32>
      %105 = arith.mulf %104, %92 : vector<2x256xf32>
      %106 = vector.shape_cast %105 : vector<2x256xf32> to vector<1x2x256xf32>
      %cst_56 = arith.constant dense<0.000000e+00> : vector<1xf32>
      %107 = vector.multi_reduction <add>, %106, %cst_56 [1, 2] : vector<1x2x256xf32> to vector<1xf32>
      %108 = vector.shape_cast %107 : vector<1xf32> to vector<1x1x1xf32>
      %109 = vector.extract %108[0, 0, 0] : f32 from vector<1x1x1xf32>
      %110 = vector.broadcast %109 : f32 to vector<1x1xf32>
      %111 = vector.shape_cast %92 : vector<2x256xf32> to vector<1x2x256xf32>
      %cst_57 = arith.constant dense<0.000000e+00> : vector<1xf32>
      %112 = vector.multi_reduction <add>, %111, %cst_57 [1, 2] : vector<1x2x256xf32> to vector<1xf32>
      %113 = vector.shape_cast %112 : vector<1xf32> to vector<1x1x1xf32>
      %114 = vector.extract %113[0, 0, 0] : f32 from vector<1x1x1xf32>
      %115 = vector.broadcast %114 : f32 to vector<1x1xf32>
      %cst_58 = arith.constant 1.000000e+00 : f32
      %116 = vector.broadcast %cst_58 : f32 to vector<1x1xf32>
      %117 = arith.maximumf %115, %116 : vector<1x1xf32>
      %118 = arith.divf %110, %117 : vector<1x1xf32>
      %c0_59 = arith.constant 0 : index
      %c0_60 = arith.constant 0 : index
      %119 = vector.load %arg5[%c0_59, %c0_60] : memref<2x16xf32, #tpu.memory_space<vmem>>, vector<2x16xf32>
      %c0_61 = arith.constant 0 : index
      %c0_62 = arith.constant 0 : index
      %c0_63 = arith.constant 0 : index
      %120 = vector.load %arg6[%c0_61, %c0_62, %c0_63] : memref<2x2x16xf32, #tpu.memory_space<vmem>>, vector<2x2x16xf32>
      %cst_64 = arith.constant dense<0.000000e+00> : vector<2x16xf32>
      %121 = vector.multi_reduction <add>, %120, %cst_64 [1] : vector<2x2x16xf32> to vector<2x16xf32>
      %cst_65 = arith.constant dense<0xFF800000> : vector<2xf32>
      %122 = vector.multi_reduction <maximumf>, %119, %cst_65 [1] : vector<2x16xf32> to vector<2xf32>
      %123 = vector.shape_cast %122 : vector<2xf32> to vector<2x1xf32>
      %124 = vector.broadcast %123 : vector<2x1xf32> to vector<2x16xf32>
      %125 = arith.subf %119, %124 : vector<2x16xf32>
      %126 = math.exp %125 : vector<2x16xf32>
      %cst_66 = arith.constant dense<0.000000e+00> : vector<2xf32>
      %127 = vector.multi_reduction <add>, %126, %cst_66 [1] : vector<2x16xf32> to vector<2xf32>
      %128 = vector.shape_cast %127 : vector<2xf32> to vector<2x1xf32>
      %129 = math.log %128 : vector<2x1xf32>
      %130 = arith.addf %123, %129 : vector<2x1xf32>
      %131 = vector.broadcast %130 : vector<2x1xf32> to vector<2x16xf32>
      %132 = arith.subf %119, %131 : vector<2x16xf32>
      %133 = arith.mulf %121, %132 : vector<2x16xf32>
      %cst_67 = arith.constant dense<0.000000e+00> : vector<2xf32>
      %134 = vector.multi_reduction <add>, %133, %cst_67 [1] : vector<2x16xf32> to vector<2xf32>
      %135 = vector.shape_cast %134 : vector<2xf32> to vector<2x1xf32>
      %cst_68 = arith.constant dense<0.000000e+00> : vector<2xf32>
      %136 = vector.multi_reduction <add>, %121, %cst_68 [1] : vector<2x16xf32> to vector<2xf32>
      %137 = vector.shape_cast %136 : vector<2xf32> to vector<2x1xf32>
      %cst_69 = arith.constant 0.000000e+00 : f32
      %138 = vector.broadcast %cst_69 : f32 to vector<2x1xf32>
      %139 = arith.subf %138, %135 : vector<2x1xf32>
      %cst_70 = arith.constant 9.99999993E-9 : f32
      %140 = vector.broadcast %cst_70 : f32 to vector<2x1xf32>
      %141 = arith.addf %137, %140 : vector<2x1xf32>
      %142 = arith.divf %139, %141 : vector<2x1xf32>
      %143 = vector.shape_cast %142 : vector<2x1xf32> to vector<1x2x1xf32>
      %cst_71 = arith.constant dense<0.000000e+00> : vector<1xf32>
      %144 = vector.multi_reduction <add>, %143, %cst_71 [1, 2] : vector<1x2x1xf32> to vector<1xf32>
      %145 = vector.shape_cast %144 : vector<1xf32> to vector<1x1x1xf32>
      %146 = vector.extract %145[0, 0, 0] : f32 from vector<1x1x1xf32>
      %147 = vector.broadcast %146 : f32 to vector<1x1xf32>
      %cst_72 = arith.constant 2.000000e+00 : f32
      %148 = vector.broadcast %cst_72 : f32 to vector<1x1xf32>
      %149 = arith.divf %147, %148 : vector<1x1xf32>
      %c0_73 = arith.constant 0 : index
      %c0_74 = arith.constant 0 : index
      %150 = vector.load %arg7[%c0_73, %c0_74] : memref<2x4xf32, #tpu.memory_space<vmem>>, vector<2x4xf32>
      %c0_75 = arith.constant 0 : index
      %c0_76 = arith.constant 0 : index
      %151 = vector.load %arg8[%c0_75, %c0_76] : memref<2x4xf32, #tpu.memory_space<vmem>>, vector<2x4xf32>
      %cst_77 = arith.constant 5.000000e-01 : f32
      %152 = vector.broadcast %cst_77 : f32 to vector<2x4xf32>
      %153 = arith.subf %151, %152 : vector<2x4xf32>
      %cst_78 = arith.constant 2.000000e+00 : f32
      %154 = vector.broadcast %cst_78 : f32 to vector<2x4xf32>
      %155 = arith.mulf %153, %154 : vector<2x4xf32>
      %cst_79 = arith.constant 0.000000e+00 : f32
      %cst_80 = arith.constant 1.000000e+00 : f32
      %156 = vector.broadcast %cst_79 : f32 to vector<2x4xf32>
      %157 = arith.maximumf %156, %155 : vector<2x4xf32>
      %158 = vector.broadcast %cst_80 : f32 to vector<2x4xf32>
      %159 = arith.minimumf %158, %157 : vector<2x4xf32>
      %cst_81 = arith.constant 0.000000e+00 : f32
      %160 = vector.broadcast %cst_81 : f32 to vector<2x4xf32>
      %161 = arith.maximumf %150, %160 : vector<2x4xf32>
      %162 = arith.mulf %150, %159 : vector<2x4xf32>
      %163 = arith.subf %161, %162 : vector<2x4xf32>
      %164 = math.absf %150 : vector<2x4xf32>
      %cst_82 = arith.constant 0.000000e+00 : f32
      %165 = vector.broadcast %cst_82 : f32 to vector<2x4xf32>
      %166 = arith.subf %165, %164 : vector<2x4xf32>
      %167 = math.exp %166 : vector<2x4xf32>
      %cst_83 = arith.constant 1.000000e+00 : f32
      %168 = vector.broadcast %cst_83 : f32 to vector<2x4xf32>
      %169 = arith.addf %168, %167 : vector<2x4xf32>
      %170 = math.log %169 : vector<2x4xf32>
      %171 = arith.addf %163, %170 : vector<2x4xf32>
      %172 = vector.shape_cast %171 : vector<2x4xf32> to vector<1x2x4xf32>
      %cst_84 = arith.constant dense<0.000000e+00> : vector<1xf32>
      %173 = vector.multi_reduction <add>, %172, %cst_84 [1, 2] : vector<1x2x4xf32> to vector<1xf32>
      %174 = vector.shape_cast %173 : vector<1xf32> to vector<1x1x1xf32>
      %175 = vector.extract %174[0, 0, 0] : f32 from vector<1x1x1xf32>
      %176 = vector.broadcast %175 : f32 to vector<1x1xf32>
      %cst_85 = arith.constant 8.000000e+00 : f32
      %177 = vector.broadcast %cst_85 : f32 to vector<1x1xf32>
      %178 = arith.divf %176, %177 : vector<1x1xf32>
      %c0_86 = arith.constant 0 : index
      %c0_87 = arith.constant 0 : index
      %179 = vector.load %arg9[%c0_86, %c0_87] : memref<2x8xf32, #tpu.memory_space<vmem>>, vector<2x8xf32>
      %c0_88 = arith.constant 0 : index
      %c0_89 = arith.constant 0 : index
      %180 = vector.load %arg10[%c0_88, %c0_89] : memref<2x8xf32, #tpu.memory_space<vmem>>, vector<2x8xf32>
      %181 = arith.subf %179, %180 : vector<2x8xf32>
      %182 = math.absf %181 : vector<2x8xf32>
      %cst_90 = arith.constant 1.000000e+00 : f32
      %183 = vector.broadcast %cst_90 : f32 to vector<2x8xf32>
      %184 = arith.cmpf olt, %182, %183 : vector<2x8xf32>
      %cst_91 = arith.constant 5.000000e-01 : f32
      %185 = vector.broadcast %cst_91 : f32 to vector<2x8xf32>
      %186 = arith.mulf %185, %181 : vector<2x8xf32>
      %187 = arith.mulf %186, %181 : vector<2x8xf32>
      %cst_92 = arith.constant 5.000000e-01 : f32
      %188 = vector.broadcast %cst_92 : f32 to vector<2x8xf32>
      %189 = arith.subf %182, %188 : vector<2x8xf32>
      %190 = arith.select %184, %187, %189 : vector<2x8xi1>, vector<2x8xf32>
      %191 = vector.shape_cast %190 : vector<2x8xf32> to vector<1x2x8xf32>
      %cst_93 = arith.constant dense<0.000000e+00> : vector<1xf32>
      %192 = vector.multi_reduction <add>, %191, %cst_93 [1, 2] : vector<1x2x8xf32> to vector<1xf32>
      %193 = vector.shape_cast %192 : vector<1xf32> to vector<1x1x1xf32>
      %194 = vector.extract %193[0, 0, 0] : f32 from vector<1x1x1xf32>
      %195 = vector.broadcast %194 : f32 to vector<1x1xf32>
      %cst_94 = arith.constant 8.000000e+00 : f32
      %196 = vector.broadcast %cst_94 : f32 to vector<1x1xf32>
      %197 = arith.divf %195, %196 : vector<1x1xf32>
      %c0_95 = arith.constant 0 : index
      %c0_96 = arith.constant 0 : index
      %c0_97 = arith.constant 0 : index
      %198 = vector.load %arg15[%c0_95, %c0_96, %c0_97] : memref<1x8x128xf32, #tpu.memory_space<vmem>>, vector<1x8x128xf32>
      %199 = vector.shape_cast %198 : vector<1x8x128xf32> to vector<8x128xf32>
      %c2_i32 = arith.constant 2 : i32
      %200 = vector.broadcast %c2_i32 : i32 to vector<8x128xi32>
      %201 = arith.cmpi eq, %1, %200 : vector<8x128xi32>
      %202 = vector.shape_cast %118 : vector<1x1xf32> to vector<1x1xf32>
      %203 = vector.broadcast %202 : vector<1x1xf32> to vector<8x128xf32>
      %204 = arith.select %201, %203, %199 : vector<8x128xi1>, vector<8x128xf32>
      %c3_i32 = arith.constant 3 : i32
      %205 = vector.broadcast %c3_i32 : i32 to vector<8x128xi32>
      %206 = arith.cmpi eq, %1, %205 : vector<8x128xi32>
      %207 = vector.shape_cast %149 : vector<1x1xf32> to vector<1x1xf32>
      %208 = vector.broadcast %207 : vector<1x1xf32> to vector<8x128xf32>
      %209 = arith.select %206, %208, %204 : vector<8x128xi1>, vector<8x128xf32>
      %c4_i32 = arith.constant 4 : i32
      %210 = vector.broadcast %c4_i32 : i32 to vector<8x128xi32>
      %211 = arith.cmpi eq, %1, %210 : vector<8x128xi32>
      %212 = vector.shape_cast %178 : vector<1x1xf32> to vector<1x1xf32>
      %213 = vector.broadcast %212 : vector<1x1xf32> to vector<8x128xf32>
      %214 = arith.select %211, %213, %209 : vector<8x128xi1>, vector<8x128xf32>
      %c5_i32 = arith.constant 5 : i32
      %215 = vector.broadcast %c5_i32 : i32 to vector<8x128xi32>
      %216 = arith.cmpi eq, %1, %215 : vector<8x128xi32>
      %217 = vector.shape_cast %197 : vector<1x1xf32> to vector<1x1xf32>
      %218 = vector.broadcast %217 : vector<1x1xf32> to vector<8x128xf32>
      %219 = arith.select %216, %218, %214 : vector<8x128xi1>, vector<8x128xf32>
      %220 = vector.shape_cast %219 : vector<8x128xf32> to vector<1x8x128xf32>
      %c0_98 = arith.constant 0 : index
      %c0_99 = arith.constant 0 : index
      %c0_100 = arith.constant 0 : index
      %221 = vector.load %arg15[%c0_98, %c0_99, %c0_100] : memref<1x8x128xf32, #tpu.memory_space<vmem>>, vector<1x8x128xf32>
      tpu.vector_store %arg15[%c0_98, %c0_99, %c0_100], %220 {strides = array<i32>} : memref<1x8x128xf32, #tpu.memory_space<vmem>>, vector<1x8x128xf32>,
    } else {
    }
    return
  }
  func.func @transform_0(%arg0: i32, %arg1: i32) -> (i32, i32) {
    %c0_i32 = arith.constant 0 : i32
    %c0_i32_0 = arith.constant 0 : i32
    %c0_i32_1 = arith.constant 0 : i32
    return %c0_i32, %c0_i32_0 : i32, i32
  }
  func.func @transform_1(%arg0: i32, %arg1: i32) -> (i32, i32) {
    %c0_i32 = arith.constant 0 : i32
    %c0_i32_0 = arith.constant 0 : i32
    %c0_i32_1 = arith.constant 0 : i32
    return %c0_i32, %c0_i32_0 : i32, i32
  }
  func.func @transform_2(%arg0: i32, %arg1: i32) -> (i32, i32) {
    %c0_i32 = arith.constant 0 : i32
    %c0_i32_0 = arith.constant 0 : i32
    %c0_i32_1 = arith.constant 0 : i32
    return %c0_i32, %c0_i32_0 : i32, i32
  }
  func.func @transform_3(%arg0: i32, %arg1: i32) -> (i32, i32) {
    %c0_i32 = arith.constant 0 : i32
    %c0_i32_0 = arith.constant 0 : i32
    %c0_i32_1 = arith.constant 0 : i32
    return %c0_i32, %c0_i32_0 : i32, i32
  }
  func.func @transform_4(%arg0: i32, %arg1: i32) -> (i32, i32, i32) {
    %c0_i32 = arith.constant 0 : i32
    %c0_i32_0 = arith.constant 0 : i32
    %c0_i32_1 = arith.constant 0 : i32
    %c0_i32_2 = arith.constant 0 : i32
    return %c0_i32, %c0_i32_0, %c0_i32_1 : i32, i32, i32
  }
  func.func @transform_5(%arg0: i32, %arg1: i32) -> (i32, i32) {
    %c0_i32 = arith.constant 0 : i32
    %c0_i32_0 = arith.constant 0 : i32
    %c0_i32_1 = arith.constant 0 : i32
    return %c0_i32, %c0_i32_0 : i32, i32
  }
  func.func @transform_6(%arg0: i32, %arg1: i32) -> (i32, i32) {
    %c0_i32 = arith.constant 0 : i32
    %c0_i32_0 = arith.constant 0 : i32
    %c0_i32_1 = arith.constant 0 : i32
    return %c0_i32, %c0_i32_0 : i32, i32
  }
  func.func @transform_7(%arg0: i32, %arg1: i32) -> (i32, i32) {
    %c0_i32 = arith.constant 0 : i32
    %c0_i32_0 = arith.constant 0 : i32
    %c0_i32_1 = arith.constant 0 : i32
    return %c0_i32, %c0_i32_0 : i32, i32
  }
  func.func @transform_8(%arg0: i32, %arg1: i32) -> (i32, i32) {
    %c0_i32 = arith.constant 0 : i32
    %c0_i32_0 = arith.constant 0 : i32
    %c0_i32_1 = arith.constant 0 : i32
    return %c0_i32, %c0_i32_0 : i32, i32
  }
  func.func @transform_9(%arg0: i32, %arg1: i32) -> (i32, i32, i32) {
    %c0_i32 = arith.constant 0 : i32
    %c0_i32_0 = arith.constant 0 : i32
    %c0_i32_1 = arith.constant 0 : i32
    return %arg0, %c0_i32, %c0_i32_0 : i32, i32, i32
  }
  func.func @transform_10(%arg0: i32, %arg1: i32) -> (i32, i32, i32) {
    %c0_i32 = arith.constant 0 : i32
    %c0_i32_0 = arith.constant 0 : i32
    return %arg0, %arg1, %c0_i32 : i32, i32, i32
  }
  func.func @transform_11(%arg0: i32, %arg1: i32) -> (i32, i32, i32) {
    %c0_i32 = arith.constant 0 : i32
    %c0_i32_0 = arith.constant 0 : i32
    return %arg0, %arg1, %c0_i32 : i32, i32, i32
  }
  func.func @transform_12(%arg0: i32, %arg1: i32) -> (i32, i32, i32) {
    %c0_i32 = arith.constant 0 : i32
    %c0_i32_0 = arith.constant 0 : i32
    return %arg0, %arg1, %c0_i32 : i32, i32, i32
  }
  func.func @transform_13(%arg0: i32, %arg1: i32) -> (i32, i32, i32) {
    %c0_i32 = arith.constant 0 : i32
    %c0_i32_0 = arith.constant 0 : i32
    %c0_i32_1 = arith.constant 0 : i32
    return %arg0, %c0_i32, %c0_i32_0 : i32, i32, i32
  }
}

</mosaic_0001>

<llo_original>
// kernel: _lambda_.1
$region0: #{_lambda_.1}
  #allocation0 [shape = 'u32[]', space=smem, size = 0x4, offset = 0x4, fixed_abs, tag = 'smem constant byte address 0x4 - core index']
  #allocation1 [shape = 'u32[144,128]{1,0:T(1,128)}', space=vmem, size = 0x12000, scoped, tag = 'internal scratch']
  #allocation2 [shape = 'f32[1,1]{1,0:T(1,128)}', space=vmem, size = 0x200, scoped, tag = 'scratch operand']
  #allocation3 [shape = 'f32[1,1]{1,0:T(1,128)}', space=vmem, size = 0x200, scoped, tag = 'scratch operand']
  #allocation4 [shape = 'f32[1,1]{1,0:T(1,128)}', space=vmem, size = 0x200, scoped, tag = 'scratch operand']
  #allocation5 [shape = 'f32[1,1]{1,0:T(1,128)}', space=vmem, size = 0x200, scoped, tag = 'scratch operand']
  %s0 = inlined_call_operand.vmem [shape: f32[2,256], index: 0, kind: input, shape index: {}]
  %s1 = inlined_call_operand.vmem [shape: f32[2,256], index: 1, kind: input, shape index: {}]
  %s2 = inlined_call_operand.vmem [shape: f32[2,256], index: 2, kind: input, shape index: {}]
  %s3 = inlined_call_operand.vmem [shape: f32[2,16], index: 3, kind: input, shape index: {}]
  %s4 = inlined_call_operand.vmem [shape: f32[2,2,16], index: 4, kind: input, shape index: {}]
  %s5 = inlined_call_operand.vmem [shape: f32[2,4], index: 5, kind: input, shape index: {}]
  %s6 = inlined_call_operand.vmem [shape: f32[2,4], index: 6, kind: input, shape index: {}]
  %s7 = inlined_call_operand.vmem [shape: f32[2,8], index: 7, kind: input, shape index: {}]
  %s8 = inlined_call_operand.vmem [shape: f32[2,8], index: 8, kind: input, shape index: {}]
  %s9 = inlined_call_operand.vmem [shape: f32[2,1,32], index: 9, kind: input, shape index: {}]
  %s10 = inlined_call_operand.vmem [shape: f32[2,256,32], index: 10, kind: input, shape index: {}]
  %s11 = inlined_call_operand.vmem [shape: f32[2,256,1], index: 11, kind: input, shape index: {}]
  %s12 = inlined_call_operand.vmem [shape: f32[2,256,1], index: 12, kind: input, shape index: {}]
  %s13 = inlined_call_operand.vmem [shape: f32[2,8,128], index: 13, kind: output, shape index: {}]
  %s14 = sld [smem:[#allocation0]]
  $region97: #{_lambda_.1} parent=0
    _
  %s16 = ssub.s32 1, %s14
  %s17 = scalar_select 0, %s16, %s14
  loop: start=0, step=1, limit=4
  $region2: #{_lambda_.1} parent=0 // loop_pre_header
    _
  $region3: #{_lambda_.1} parent=0 // loop_header
    %s19 = sphi 0, %s23
    %p20 = scmp.ge.s32.totalorder %s19, 4
    %s26 = sphi 0, %s38
    %s27 = sphi 0, %s34
    %s28 = sphi 0, %s26
    %s29 = sphi 0, %s27
    %s30 = sphi 0, %s28
    %s31 = sphi 0, %s29
    %s39 = sphi 0, %s39
    %s41 = sphi 0, %s39
    %s42 = sphi 0, %s41
    %s56 = sphi 0, %s42
    %s60 = sphi 0, %s60
    %s62 = sphi 0, %s60
    %s63 = sphi 0, %s62
    %s77 = sphi 0, %s63
    %s81 = sphi 0, %s81
    %s83 = sphi 0, %s81
    %s84 = sphi 0, %s83
    %s98 = sphi 0, %s84
    %s102 = sphi 0, %s102
    %s104 = sphi 0, %s102
    %s105 = sphi 0, %s104
    %s119 = sphi 0, %s105
    %s123 = sphi 0, %s123
    %s125 = sphi 0, %s123
    %s126 = sphi 0, %s125
    %s140 = sphi 0, %s126
    %s144 = sphi 0, %s144
    %s146 = sphi 0, %s144
    %s147 = sphi 0, %s146
    %s161 = sphi 0, %s147
    %s165 = sphi 0, %s165
    %s167 = sphi 0, %s165
    %s168 = sphi 0, %s167
    %s182 = sphi 0, %s168
    %s186 = sphi 0, %s186
    %s188 = sphi 0, %s186
    %s189 = sphi 0, %s188
    %s203 = sphi 0, %s189
    %s207 = sphi 0, %s207
    %s209 = sphi 0, %s207
    %s210 = sphi 0, %s209
    %s224 = sphi 0, %s210
    %s230 = sphi 0, %s232
    %s233 = sphi 0, %s230
    %s234 = sphi 0, %s233
    %s250 = sphi 0, %s234
    %s258 = sphi 0, %s260
    %s261 = sphi 0, %s258
    %s262 = sphi 0, %s261
    %s278 = sphi 0, %s262
    %s286 = sphi 0, %s288
    %s289 = sphi 0, %s286
    %s290 = sphi 0, %s289
    %s306 = sphi 0, %s290
    %s314 = sphi 0, %s316
    %s317 = sphi 0, %s314
    %s318 = sphi 0, %s317
    %s334 = sphi 0, %s318
    %s340 = sphi 0, %s342
    %s343 = sphi 0, %s340
    %s344 = sphi 0, %s343
    %s360 = sphi 0, %s344
  $region4: #{_lambda_.1} parent=0 // loop_header_branch
    %22 = sbr.rel (%p20) target = $region8
  $region5: #{_lambda_.1} parent=0 // loop_body
    %s24 = ssub.s32 %s19, 1
    %s25 = ssub.s32 %s19, 2
    %s32 = sadd.s32 1, %s27
    %p33 = scmp.ge.s32.totalorder %s32, 1
    %s34 = scalar_select %p33, 0, %s32
    %s35 = sadd.s32 1, %s26
    %s36 = scalar_select %p33, %s35, %s26
    %p37 = scmp.ge.s32.totalorder %s36, 2
    %s38 = scalar_select %p37, 0, %s36
    %s40 = sadd.s32 %s39, 1
    %p43 = scmp.eq.s32.totalorder %s19, 1
    %p44 = scmp.ne.s32.totalorder %s39, %s41
    %p45 = scmp.eq.s32.totalorder %s19, 0
    %p46 = por %p44, %p45
    %p47 = scmp.ne.s32.totalorder %s39, %s41
    %p48 = scmp.eq.s32.totalorder %s24, 1
    %p49 = por %p47, %p48
    %p50 = scmp.ne.s32.totalorder %s41, %s42
    %p51 = scmp.eq.s32.totalorder %s24, 0
    %p52 = por %p50, %p51
    %p53 = scmp.ne.s32.totalorder %s41, %s42
    %p54 = scmp.eq.s32.totalorder %s25, 1
    %p55 = por %p53, %p54
    %p57 = scmp.ne.s32.totalorder %s42, %s56
    %p58 = scmp.eq.s32.totalorder %s25, 0
    %p59 = por %p57, %p58
    %s61 = sadd.s32 %s60, 1
    %p64 = scmp.eq.s32.totalorder %s19, 1
    %p65 = scmp.ne.s32.totalorder %s60, %s62
    %p66 = scmp.eq.s32.totalorder %s19, 0
    %p67 = por %p65, %p66
    %p68 = scmp.ne.s32.totalorder %s60, %s62
    %p69 = scmp.eq.s32.totalorder %s24, 1
    %p70 = por %p68, %p69
    %p71 = scmp.ne.s32.totalorder %s62, %s63
    %p72 = scmp.eq.s32.totalorder %s24, 0
    %p73 = por %p71, %p72
    %p74 = scmp.ne.s32.totalorder %s62, %s63
    %p75 = scmp.eq.s32.totalorder %s25, 1
    %p76 = por %p74, %p75
    %p78 = scmp.ne.s32.totalorder %s63, %s77
    %p79 = scmp.eq.s32.totalorder %s25, 0
    %p80 = por %p78, %p79
    %s82 = sadd.s32 %s81, 1
    %p85 = scmp.eq.s32.totalorder %s19, 1
    %p86 = scmp.ne.s32.totalorder %s81, %s83
    %p87 = scmp.eq.s32.totalorder %s19, 0
    %p88 = por %p86, %p87
    %p89 = scmp.ne.s32.totalorder %s81, %s83
    %p90 = scmp.eq.s32.totalorder %s24, 1
    %p91 = por %p89, %p90
    %p92 = scmp.ne.s32.totalorder %s83, %s84
    %p93 = scmp.eq.s32.totalorder %s24, 0
    %p94 = por %p92, %p93
    %p95 = scmp.ne.s32.totalorder %s83, %s84
    %p96 = scmp.eq.s32.totalorder %s25, 1
    %p97 = por %p95, %p96
    %p99 = scmp.ne.s32.totalorder %s84, %s98
    %p100 = scmp.eq.s32.totalorder %s25, 0
    %p101 = por %p99, %p100
    %s103 = sadd.s32 %s102, 1
    %p106 = scmp.eq.s32.totalorder %s19, 1
    %p107 = scmp.ne.s32.totalorder %s102, %s104
    %p108 = scmp.eq.s32.totalorder %s19, 0
    %p109 = por %p107, %p108
    %p110 = scmp.ne.s32.totalorder %s102, %s104
    %p111 = scmp.eq.s32.totalorder %s24, 1
    %p112 = por %p110, %p111
    %p113 = scmp.ne.s32.totalorder %s104, %s105
    %p114 = scmp.eq.s32.totalorder %s24, 0
    %p115 = por %p113, %p114
    %p116 = scmp.ne.s32.totalorder %s104, %s105
    %p117 = scmp.eq.s32.totalorder %s25, 1
    %p118 = por %p116, %p117
    %p120 = scmp.ne.s32.totalorder %s105, %s119
    %p121 = scmp.eq.s32.totalorder %s25, 0
    %p122 = por %p120, %p121
    %s124 = sadd.s32 %s123, 1
    %p127 = scmp.eq.s32.totalorder %s19, 1
    %p128 = scmp.ne.s32.totalorder %s123, %s125
    %p129 = scmp.eq.s32.totalorder %s19, 0
    %p130 = por %p128, %p129
    %p131 = scmp.ne.s32.totalorder %s123, %s125
    %p132 = scmp.eq.s32.totalorder %s24, 1
    %p133 = por %p131, %p132
    %p134 = scmp.ne.s32.totalorder %s125, %s126
    %p135 = scmp.eq.s32.totalorder %s24, 0
    %p136 = por %p134, %p135
    %p137 = scmp.ne.s32.totalorder %s125, %s126
    %p138 = scmp.eq.s32.totalorder %s25, 1
    %p139 = por %p137, %p138
    %p141 = scmp.ne.s32.totalorder %s126, %s140
    %p142 = scmp.eq.s32.totalorder %s25, 0
    %p143 = por %p141, %p142
    %s145 = sadd.s32 %s144, 1
    %p148 = scmp.eq.s32.totalorder %s19, 1
    %p149 = scmp.ne.s32.totalorder %s144, %s146
    %p150 = scmp.eq.s32.totalorder %s19, 0
    %p151 = por %p149, %p150
    %p152 = scmp.ne.s32.totalorder %s144, %s146
    %p153 = scmp.eq.s32.totalorder %s24, 1
    %p154 = por %p152, %p153
    %p155 = scmp.ne.s32.totalorder %s146, %s147
    %p156 = scmp.eq.s32.totalorder %s24, 0
    %p157 = por %p155, %p156
    %p158 = scmp.ne.s32.totalorder %s146, %s147
    %p159 = scmp.eq.s32.totalorder %s25, 1
    %p160 = por %p158, %p159
    %p162 = scmp.ne.s32.totalorder %s147, %s161
    %p163 = scmp.eq.s32.totalorder %s25, 0
    %p164 = por %p162, %p163
    %s166 = sadd.s32 %s165, 1
    %p169 = scmp.eq.s32.totalorder %s19, 1
    %p170 = scmp.ne.s32.totalorder %s165, %s167
    %p171 = scmp.eq.s32.totalorder %s19, 0
    %p172 = por %p170, %p171
    %p173 = scmp.ne.s32.totalorder %s165, %s167
    %p174 = scmp.eq.s32.totalorder %s24, 1
    %p175 = por %p173, %p174
    %p176 = scmp.ne.s32.totalorder %s167, %s168
    %p177 = scmp.eq.s32.totalorder %s24, 0
    %p178 = por %p176, %p177
    %p179 = scmp.ne.s32.totalorder %s167, %s168
    %p180 = scmp.eq.s32.totalorder %s25, 1
    %p181 = por %p179, %p180
    %p183 = scmp.ne.s32.totalorder %s168, %s182
    %p184 = scmp.eq.s32.totalorder %s25, 0
    %p185 = por %p183, %p184
    %s187 = sadd.s32 %s186, 1
    %p190 = scmp.eq.s32.totalorder %s19, 1
    %p191 = scmp.ne.s32.totalorder %s186, %s188
    %p192 = scmp.eq.s32.totalorder %s19, 0
    %p193 = por %p191, %p192
    %p194 = scmp.ne.s32.totalorder %s186, %s188
    %p195 = scmp.eq.s32.totalorder %s24, 1
    %p196 = por %p194, %p195
    %p197 = scmp.ne.s32.totalorder %s188, %s189
    %p198 = scmp.eq.s32.totalorder %s24, 0
    %p199 = por %p197, %p198
    %p200 = scmp.ne.s32.totalorder %s188, %s189
    %p201 = scmp.eq.s32.totalorder %s25, 1
    %p202 = por %p200, %p201
    %p204 = scmp.ne.s32.totalorder %s189, %s203
    %p205 = scmp.eq.s32.totalorder %s25, 0
    %p206 = por %p204, %p205
    %s208 = sadd.s32 %s207, 1
    %p211 = scmp.eq.s32.totalorder %s19, 1
    %p212 = scmp.ne.s32.totalorder %s207, %s209
    %p213 = scmp.eq.s32.totalorder %s19, 0
    %p214 = por %p212, %p213
    %p215 = scmp.ne.s32.totalorder %s207, %s209
    %p216 = scmp.eq.s32.totalorder %s24, 1
    %p217 = por %p215, %p216
    %p218 = scmp.ne.s32.totalorder %s209, %s210
    %p219 = scmp.eq.s32.totalorder %s24, 0
    %p220 = por %p218, %p219
    %p221 = scmp.ne.s32.totalorder %s209, %s210
    %p222 = scmp.eq.s32.totalorder %s25, 1
    %p223 = por %p221, %p222
    %p225 = scmp.ne.s32.totalorder %s210, %s224
    %p226 = scmp.eq.s32.totalorder %s25, 0
    %p227 = por %p225, %p226
    %s228 = ssub.s32 %s26, %s38
    %p229 = scmp.eq.s32.totalorder %s228, 0
    %s231 = sadd.s32 %s230, 1
    %s232 = scalar_select %p229, %s230, %s231
    %p235 = pneg %p229
    %p236 = scmp.eq.s32.totalorder %s19, 1
    %p237 = por %p235, %p236
    %p238 = scmp.ne.s32.totalorder %s230, %s233
    %p239 = scmp.eq.s32.totalorder %s19, 0
    %p240 = por %p238, %p239
    %p241 = scmp.ne.s32.totalorder %s230, %s233
    %p242 = scmp.eq.s32.totalorder %s24, 1
    %p243 = por %p241, %p242
    %p244 = scmp.ne.s32.totalorder %s233, %s234
    %p245 = scmp.eq.s32.totalorder %s24, 0
    %p246 = por %p244, %p245
    %p247 = scmp.ne.s32.totalorder %s233, %s234
    %p248 = scmp.eq.s32.totalorder %s25, 1
    %p249 = por %p247, %p248
    %p251 = scmp.ne.s32.totalorder %s234, %s250
    %p252 = scmp.eq.s32.totalorder %s25, 0
    %p253 = por %p251, %p252
    %s254 = ssub.s32 %s26, %s38
    %s255 = ssub.s32 %s27, %s34
    %s256 = sor.u32 %s254, %s255
    %p257 = scmp.eq.s32.totalorder %s256, 0
    %s259 = sadd.s32 %s258, 1
    %s260 = scalar_select %p257, %s258, %s259
    %p263 = pneg %p257
    %p264 = scmp.eq.s32.totalorder %s19, 1
    %p265 = por %p263, %p264
    %p266 = scmp.ne.s32.totalorder %s258, %s261
    %p267 = scmp.eq.s32.totalorder %s19, 0
    %p268 = por %p266, %p267
    %p269 = scmp.ne.s32.totalorder %s258, %s261
    %p270 = scmp.eq.s32.totalorder %s24, 1
    %p271 = por %p269, %p270
    %p272 = scmp.ne.s32.totalorder %s261, %s262
    %p273 = scmp.eq.s32.totalorder %s24, 0
    %p274 = por %p272, %p273
    %p275 = scmp.ne.s32.totalorder %s261, %s262
    %p276 = scmp.eq.s32.totalorder %s25, 1
    %p277 = por %p275, %p276
    %p279 = scmp.ne.s32.totalorder %s262, %s278
    %p280 = scmp.eq.s32.totalorder %s25, 0
    %p281 = por %p279, %p280
    %s282 = ssub.s32 %s26, %s38
    %s283 = ssub.s32 %s27, %s34
    %s284 = sor.u32 %s282, %s283
    %p285 = scmp.eq.s32.totalorder %s284, 0
    %s287 = sadd.s32 %s286, 1
    %s288 = scalar_select %p285, %s286, %s287
    %p291 = pneg %p285
    %p292 = scmp.eq.s32.totalorder %s19, 1
    %p293 = por %p291, %p292
    %p294 = scmp.ne.s32.totalorder %s286, %s289
    %p295 = scmp.eq.s32.totalorder %s19, 0
    %p296 = por %p294, %p295
    %p297 = scmp.ne.s32.totalorder %s286, %s289
    %p298 = scmp.eq.s32.totalorder %s24, 1
    %p299 = por %p297, %p298
    %p300 = scmp.ne.s32.totalorder %s289, %s290
    %p301 = scmp.eq.s32.totalorder %s24, 0
    %p302 = por %p300, %p301
    %p303 = scmp.ne.s32.totalorder %s289, %s290
    %p304 = scmp.eq.s32.totalorder %s25, 1
    %p305 = por %p303, %p304
    %p307 = scmp.ne.s32.totalorder %s290, %s306
    %p308 = scmp.eq.s32.totalorder %s25, 0
    %p309 = por %p307, %p308
    %s310 = ssub.s32 %s26, %s38
    %s311 = ssub.s32 %s27, %s34
    %s312 = sor.u32 %s310, %s311
    %p313 = scmp.eq.s32.totalorder %s312, 0
    %s315 = sadd.s32 %s314, 1
    %s316 = scalar_select %p313, %s314, %s315
    %p319 = pneg %p313
    %p320 = scmp.eq.s32.totalorder %s19, 1
    %p321 = por %p319, %p320
    %p322 = scmp.ne.s32.totalorder %s314, %s317
    %p323 = scmp.eq.s32.totalorder %s19, 0
    %p324 = por %p322, %p323
    %p325 = scmp.ne.s32.totalorder %s314, %s317
    %p326 = scmp.eq.s32.totalorder %s24, 1
    %p327 = por %p325, %p326
    %p328 = scmp.ne.s32.totalorder %s317, %s318
    %p329 = scmp.eq.s32.totalorder %s24, 0
    %p330 = por %p328, %p329
    %p331 = scmp.ne.s32.totalorder %s317, %s318
    %p332 = scmp.eq.s32.totalorder %s25, 1
    %p333 = por %p331, %p332
    %p335 = scmp.ne.s32.totalorder %s318, %s334
    %p336 = scmp.eq.s32.totalorder %s25, 0
    %p337 = por %p335, %p336
    %s338 = ssub.s32 %s26, %s38
    %p339 = scmp.eq.s32.totalorder %s338, 0
    %s341 = sadd.s32 %s340, 1
    %s342 = scalar_select %p339, %s340, %s341
    %p345 = pneg %p339
    %p346 = scmp.eq.s32.totalorder %s19, 1
    %p347 = por %p345, %p346
    %p348 = scmp.ne.s32.totalorder %s340, %s343
    %p349 = scmp.eq.s32.totalorder %s19, 0
    %p350 = por %p348, %p349
    %p351 = scmp.ne.s32.totalorder %s340, %s343
    %p352 = scmp.eq.s32.totalorder %s24, 1
    %p353 = por %p351, %p352
    %p354 = scmp.ne.s32.totalorder %s343, %s344
    %p355 = scmp.eq.s32.totalorder %s24, 0
    %p356 = por %p354, %p355
    %p357 = scmp.ne.s32.totalorder %s343, %s344
    %p358 = scmp.eq.s32.totalorder %s25, 1
    %p359 = por %p357, %p358
    %p361 = scmp.ne.s32.totalorder %s344, %s360
    %p362 = scmp.eq.s32.totalorder %s25, 0
    %p363 = por %p361, %p362
    %p364 = scmp.le.s32.totalorder 1, %s19
    %p365 = scmp.lt.s32.totalorder %s19, 3
    %p366 = pnand %p364, %p365
    %p367 = pneg %p366
    // Predicated region
    $region9: #{_lambda_.1} parent=5 // pred_check
      _
    $region10: #{_lambda_.1} parent=5 // pred_check_branch
      %369 = sbr.rel (%p366) target = $region12
    $region11: #{_lambda_.1} parent=5 // pred_region
      %s370 = ssub.s32 %s19, 1
      // Predicated region
      $region13: #{_lambda_.1} parent=11 // pred_check
        %p371 = pneg %p52
      $region14: #{_lambda_.1} parent=11 // pred_check_branch
        %373 = sbr.rel (%p371) target = $region16
      $region15: #{_lambda_.1} parent=11 // pred_region
        _
      $region16: #{_lambda_.1} parent=11 // pred_fallthru
        _
      // Predicated region
      $region17: #{_lambda_.1} parent=11 // pred_check
        %p374 = pneg %p73
      $region18: #{_lambda_.1} parent=11 // pred_check_branch
        %376 = sbr.rel (%p374) target = $region20
      $region19: #{_lambda_.1} parent=11 // pred_region
        _
      $region20: #{_lambda_.1} parent=11 // pred_fallthru
        _
      // Predicated region
      $region21: #{_lambda_.1} parent=11 // pred_check
        %p377 = pneg %p94
      $region22: #{_lambda_.1} parent=11 // pred_check_branch
        %379 = sbr.rel (%p377) target = $region24
      $region23: #{_lambda_.1} parent=11 // pred_region
        _
      $region24: #{_lambda_.1} parent=11 // pred_fallthru
        _
      // Predicated region
      $region25: #{_lambda_.1} parent=11 // pred_check
        %p380 = pneg %p115
      $region26: #{_lambda_.1} parent=11 // pred_check_branch
        %382 = sbr.rel (%p380) target = $region28
      $region27: #{_lambda_.1} parent=11 // pred_region
        _
      $region28: #{_lambda_.1} parent=11 // pred_fallthru
        _
      // Predicated region
      $region29: #{_lambda_.1} parent=11 // pred_check
        %p383 = pneg %p136
      $region30: #{_lambda_.1} parent=11 // pred_check_branch
        %385 = sbr.rel (%p383) target = $region32
      $region31: #{_lambda_.1} parent=11 // pred_region
        _
      $region32: #{_lambda_.1} parent=11 // pred_fallthru
        _
      // Predicated region
      $region33: #{_lambda_.1} parent=11 // pred_check
        %p386 = pneg %p157
      $region34: #{_lambda_.1} parent=11 // pred_check_branch
        %388 = sbr.rel (%p386) target = $region36
      $region35: #{_lambda_.1} parent=11 // pred_region
        _
      $region36: #{_lambda_.1} parent=11 // pred_fallthru
        _
      // Predicated region
      $region37: #{_lambda_.1} parent=11 // pred_check
        %p389 = pneg %p178
      $region38: #{_lambda_.1} parent=11 // pred_check_branch
        %391 = sbr.rel (%p389) target = $region40
      $region39: #{_lambda_.1} parent=11 // pred_region
        _
      $region40: #{_lambda_.1} parent=11 // pred_fallthru
        _
      // Predicated region
      $region41: #{_lambda_.1} parent=11 // pred_check
        %p392 = pneg %p199
      $region42: #{_lambda_.1} parent=11 // pred_check_branch
        %394 = sbr.rel (%p392) target = $region44
      $region43: #{_lambda_.1} parent=11 // pred_region
        _
      $region44: #{_lambda_.1} parent=11 // pred_fallthru
        _
      // Predicated region
      $region45: #{_lambda_.1} parent=11 // pred_check
        %p395 = pneg %p220
      $region46: #{_lambda_.1} parent=11 // pred_check_branch
        %397 = sbr.rel (%p395) target = $region48
      $region47: #{_lambda_.1} parent=11 // pred_region
        _
      $region48: #{_lambda_.1} parent=11 // pred_fallthru
        _
    $region12: #{_lambda_.1} parent=5 // pred_fallthru
      _
    %p398 = scmp.lt.s32.totalorder %s19, 2
    // Predicated region
    $region49: #{_lambda_.1} parent=5 // pred_check
      %p399 = pneg %p398
    $region50: #{_lambda_.1} parent=5 // pred_check_branch
      %401 = sbr.rel (%p399) target = $region52
    $region51: #{_lambda_.1} parent=5 // pred_region
      // Predicated region
      $region53: #{_lambda_.1} parent=51 // pred_check
        %p402 = pneg %p240
      $region54: #{_lambda_.1} parent=51 // pred_check_branch
        %404 = sbr.rel (%p402) target = $region56
      $region55: #{_lambda_.1} parent=51 // pred_region
        %p405 = scmp.lt.s32.totalorder %s26, 1
        %s406 = scalar_select %p405, %s26, 1
        %s407 = scalar_lea.vmem %s9, %s406
      $region56: #{_lambda_.1} parent=51 // pred_fallthru
        _
      // Predicated region
      $region57: #{_lambda_.1} parent=51 // pred_check
        %p408 = pneg %p268
      $region58: #{_lambda_.1} parent=51 // pred_check_branch
        %410 = sbr.rel (%p408) target = $region60
      $region59: #{_lambda_.1} parent=51 // pred_region
        %s411 = smul.u32 32, %s27
        %p412 = scmp.lt.s32.totalorder %s26, 1
        %s413 = scalar_select %p412, %s26, 1
        %p414 = scmp.lt.s32.totalorder %s411, 31
        %s415 = scalar_select %p414, %s411, 31
        %s416 = smul.addr %s413, 32
        %s417 = sadd.s32 %s415, %s416
        %s418 = smul.addr %s417, 8
        %s419 = scalar_lea.vmem %s10, %s418
        %s420 = smul.u32 32, %s27
      $region60: #{_lambda_.1} parent=51 // pred_fallthru
        _
      // Predicated region
      $region61: #{_lambda_.1} parent=51 // pred_check
        %p421 = pneg %p296
      $region62: #{_lambda_.1} parent=51 // pred_check_branch
        %423 = sbr.rel (%p421) target = $region64
      $region63: #{_lambda_.1} parent=51 // pred_region
        %s424 = smul.u32 32, %s27
        %p425 = scmp.lt.s32.totalorder %s26, 1
        %s426 = scalar_select %p425, %s26, 1
        %p427 = scmp.lt.s32.totalorder %s424, 31
        %s428 = scalar_select %p427, %s424, 31
        %s429 = smul.addr %s426, 32
        %s430 = sadd.s32 %s428, %s429
        %s431 = smul.addr %s430, 8
        %s432 = scalar_lea.vmem %s11, %s431
        %s433 = smul.u32 32, %s27
      $region64: #{_lambda_.1} parent=51 // pred_fallthru
        _
      // Predicated region
      $region65: #{_lambda_.1} parent=51 // pred_check
        %p434 = pneg %p324
      $region66: #{_lambda_.1} parent=51 // pred_check_branch
        %436 = sbr.rel (%p434) target = $region68
      $region67: #{_lambda_.1} parent=51 // pred_region
        %s437 = smul.u32 32, %s27
        %p438 = scmp.lt.s32.totalorder %s26, 1
        %s439 = scalar_select %p438, %s26, 1
        %p440 = scmp.lt.s32.totalorder %s437, 31
        %s441 = scalar_select %p440, %s437, 31
        %s442 = smul.addr %s439, 32
        %s443 = sadd.s32 %s441, %s442
        %s444 = smul.addr %s443, 8
        %s445 = scalar_lea.vmem %s12, %s444
        %s446 = smul.u32 32, %s27
      $region68: #{_lambda_.1} parent=51 // pred_fallthru
        _
    $region52: #{_lambda_.1} parent=5 // pred_fallthru
      _
    %p447 = scmp.le.s32.totalorder 1, %s19
    %p448 = scmp.lt.s32.totalorder %s19, 3
    %p449 = pnand %p447, %p448
    %p450 = pneg %p449
    // Predicated region
    $region69: #{_lambda_.1} parent=5 // pred_check
      _
    $region70: #{_lambda_.1} parent=5 // pred_check_branch
      %452 = sbr.rel (%p449) target = $region72
    $region71: #{_lambda_.1} parent=5 // pred_region
      %s453 = ssub.s32 %s19, 1
      %p454 = pneg %p52
      %p455 = pneg %p49
      %p456 = pneg %p73
      %p457 = pneg %p70
      %p458 = pneg %p94
      %p459 = pneg %p91
      %p460 = pneg %p115
      %p461 = pneg %p112
      %p462 = pneg %p136
      %p463 = pneg %p133
      %p464 = pneg %p157
      %p465 = pneg %p154
      %p466 = pneg %p178
      %p467 = pneg %p175
      %p468 = pneg %p199
      %p469 = pneg %p196
      %p470 = pneg %p220
      %p471 = pneg %p217
      %p472 = scmp.lt.s32.totalorder %s28, 1
      %s473 = scalar_select %p472, %s28, 1
      %s474 = scalar_lea.vmem %s9, %s473
      %p475 = pneg %p246
      %p476 = pneg %p243
      %s477 = smul.u32 32, %s29
      %p478 = scmp.lt.s32.totalorder %s28, 1
      %s479 = scalar_select %p478, %s28, 1
      %p480 = scmp.lt.s32.totalorder %s477, 31
      %s481 = scalar_select %p480, %s477, 31
      %s482 = smul.addr %s479, 32
      %s483 = sadd.s32 %s481, %s482
      %s484 = smul.addr %s483, 8
      %s485 = scalar_lea.vmem %s10, %s484
      %p486 = pneg %p274
      %p487 = pneg %p271
      %s488 = smul.u32 32, %s29
      %p489 = scmp.lt.s32.totalorder %s28, 1
      %s490 = scalar_select %p489, %s28, 1
      %p491 = scmp.lt.s32.totalorder %s488, 31
      %s492 = scalar_select %p491, %s488, 31
      %s493 = smul.addr %s490, 32
      %s494 = sadd.s32 %s492, %s493
      %s495 = smul.addr %s494, 8
      %s496 = scalar_lea.vmem %s11, %s495
      %p497 = pneg %p302
      %p498 = pneg %p299
      %s499 = smul.u32 32, %s29
      %p500 = scmp.lt.s32.totalorder %s28, 1
      %s501 = scalar_select %p500, %s28, 1
      %p502 = scmp.lt.s32.totalorder %s499, 31
      %s503 = scalar_select %p502, %s499, 31
      %s504 = smul.addr %s501, 32
      %s505 = sadd.s32 %s503, %s504
      %s506 = smul.addr %s505, 8
      %s507 = scalar_lea.vmem %s12, %s506
      %p508 = pneg %p330
      %p509 = pneg %p327
      %p510 = pneg %p356
      %p511 = pneg %p353
      %p512 = scmp.lt.s32.totalorder %s28, 1
      %s513 = scalar_select %p512, %s28, 1
      %s514 = smul.addr %s513, 8
      %s515 = scalar_lea.vmem %s13, %s514
      %p516 = scmp.lt.s32.totalorder %s28, 1
      %s517 = scalar_select %p516, %s28, 1
      %s518 = scalar_lea.vmem %s9, %s517
      %s519 = smul.u32 32, %s29
      %p520 = scmp.lt.s32.totalorder %s28, 1
      %s521 = scalar_select %p520, %s28, 1
      %p522 = scmp.lt.s32.totalorder %s519, 31
      %s523 = scalar_select %p522, %s519, 31
      %s524 = smul.addr %s521, 32
      %s525 = sadd.s32 %s523, %s524
      %s526 = smul.addr %s525, 8
      %s527 = scalar_lea.vmem %s10, %s526
      %s528 = smul.u32 32, %s29
      %s529 = smul.u32 32, %s29
      %p530 = scmp.lt.s32.totalorder %s28, 1
      %s531 = scalar_select %p530, %s28, 1
      %p532 = scmp.lt.s32.totalorder %s529, 31
      %s533 = scalar_select %p532, %s529, 31
      %s534 = smul.addr %s531, 32
      %s535 = sadd.s32 %s533, %s534
      %s536 = smul.addr %s535, 8
      %s537 = scalar_lea.vmem %s11, %s536
      %s538 = smul.u32 32, %s29
      %s539 = smul.u32 32, %s29
      %p540 = scmp.lt.s32.totalorder %s28, 1
      %s541 = scalar_select %p540, %s28, 1
      %p542 = scmp.lt.s32.totalorder %s539, 31
      %s543 = scalar_select %p542, %s539, 31
      %s544 = smul.addr %s541, 32
      %s545 = sadd.s32 %s543, %s544
      %s546 = smul.addr %s545, 8
      %s547 = scalar_lea.vmem %s12, %s546
      %s548 = smul.u32 32, %s29
      %p549 = scmp.lt.s32.totalorder %s28, 1
      %s550 = scalar_select %p549, %s28, 1
      %s551 = smul.addr %s550, 8
      %s552 = scalar_lea.vmem %s13, %s551
      %p553 = scmp.eq.s32.totalorder %s29, 0
      %v554 = vlaneseq
      %v555 = vand.u32 %v554, 127
      // Predicated region
      $region73: #{_lambda_.1} parent=71 // pred_check
        %p556 = pneg %p553
      $region74: #{_lambda_.1} parent=71 // pred_check_branch
        %558 = sbr.rel (%p556) target = $region76
      $region75: #{_lambda_.1} parent=71 // pred_region
        %vm559 = vcmask 0
        %560 = vst.msk [vmem:[#allocation2] sm:$0x1] %vm559, 0.0
        %561 = vst.msk [vmem:[#allocation3] sm:$0x1] %vm559, 0.0
        %562 = vst.msk [vmem:[#allocation4] sm:$0x1] %vm559, 0.0
        %563 = vst.msk [vmem:[#allocation5] sm:$0x1] %vm559, 0.0
      $region76: #{_lambda_.1} parent=71 // pred_fallthru
        _
      %v564 = vld [vmem:[%s518] sm:$0x1]
      %v565 = vld [vmem:[%s527] sm:$0xff]
      %v566 = vld [vmem:[%s527 + $0x8] sm:$0xff]
      %v567 = vld [vmem:[%s527 + $0x10] sm:$0xff]
      %v568 = vld [vmem:[%s527 + $0x18] sm:$0xff]
      %v569 = vld [vmem:[%s527 + $0x20] sm:$0xff]
      %v570 = vld [vmem:[%s527 + $0x28] sm:$0xff]
      %v571 = vld [vmem:[%s527 + $0x30] sm:$0xff]
      %v572 = vld [vmem:[%s527 + $0x38] sm:$0xff]
      %v573 = vld [vmem:[%s527 + $0x40] sm:$0xff]
      %v574 = vld [vmem:[%s527 + $0x48] sm:$0xff]
      %v575 = vld [vmem:[%s527 + $0x50] sm:$0xff]
      %v576 = vld [vmem:[%s527 + $0x58] sm:$0xff]
      %v577 = vld [vmem:[%s527 + $0x60] sm:$0xff]
      %v578 = vld [vmem:[%s527 + $0x68] sm:$0xff]
      %v579 = vld [vmem:[%s527 + $0x70] sm:$0xff]
      %v580 = vld [vmem:[%s527 + $0x78] sm:$0xff]
      %v581 = vld [vmem:[%s527 + $0x80] sm:$0xff]
      %v582 = vld [vmem:[%s527 + $0x88] sm:$0xff]
      %v583 = vld [vmem:[%s527 + $0x90] sm:$0xff]
      %v584 = vld [vmem:[%s527 + $0x98] sm:$0xff]
      %v585 = vld [vmem:[%s527 + $0xa0] sm:$0xff]
      %v586 = vld [vmem:[%s527 + $0xa8] sm:$0xff]
      %v587 = vld [vmem:[%s527 + $0xb0] sm:$0xff]
      %v588 = vld [vmem:[%s527 + $0xb8] sm:$0xff]
      %v589 = vld [vmem:[%s527 + $0xc0] sm:$0xff]
      %v590 = vld [vmem:[%s527 + $0xc8] sm:$0xff]
      %v591 = vld [vmem:[%s527 + $0xd0] sm:$0xff]
      %v592 = vld [vmem:[%s527 + $0xd8] sm:$0xff]
      %v593 = vld [vmem:[%s527 + $0xe0] sm:$0xff]
      %v594 = vld [vmem:[%s527 + $0xe8] sm:$0xff]
      %v595 = vld [vmem:[%s527 + $0xf0] sm:$0xff]
      %v596 = vld [vmem:[%s527 + $0xf8] sm:$0xff]
      %v597 = vld [vmem:[%s537] sm:$0xff]
      %v598 = vld [vmem:[%s537 + $0x8] sm:$0xff]
      %v599 = vld [vmem:[%s537 + $0x10] sm:$0xff]
      %v600 = vld [vmem:[%s537 + $0x18] sm:$0xff]
      %v601 = vld [vmem:[%s537 + $0x20] sm:$0xff]
      %v602 = vld [vmem:[%s537 + $0x28] sm:$0xff]
      %v603 = vld [vmem:[%s537 + $0x30] sm:$0xff]
      %v604 = vld [vmem:[%s537 + $0x38] sm:$0xff]
      %v605 = vld [vmem:[%s537 + $0x40] sm:$0xff]
      %v606 = vld [vmem:[%s537 + $0x48] sm:$0xff]
      %v607 = vld [vmem:[%s537 + $0x50] sm:$0xff]
      %v608 = vld [vmem:[%s537 + $0x58] sm:$0xff]
      %v609 = vld [vmem:[%s537 + $0x60] sm:$0xff]
      %v610 = vld [vmem:[%s537 + $0x68] sm:$0xff]
      %v611 = vld [vmem:[%s537 + $0x70] sm:$0xff]
      %v612 = vld [vmem:[%s537 + $0x78] sm:$0xff]
      %v613 = vld [vmem:[%s537 + $0x80] sm:$0xff]
      %v614 = vld [vmem:[%s537 + $0x88] sm:$0xff]
      %v615 = vld [vmem:[%s537 + $0x90] sm:$0xff]
      %v616 = vld [vmem:[%s537 + $0x98] sm:$0xff]
      %v617 = vld [vmem:[%s537 + $0xa0] sm:$0xff]
      %v618 = vld [vmem:[%s537 + $0xa8] sm:$0xff]
      %v619 = vld [vmem:[%s537 + $0xb0] sm:$0xff]
      %v620 = vld [vmem:[%s537 + $0xb8] sm:$0xff]
      %v621 = vld [vmem:[%s537 + $0xc0] sm:$0xff]
      %v622 = vld [vmem:[%s537 + $0xc8] sm:$0xff]
      %v623 = vld [vmem:[%s537 + $0xd0] sm:$0xff]
      %v624 = vld [vmem:[%s537 + $0xd8] sm:$0xff]
      %v625 = vld [vmem:[%s537 + $0xe0] sm:$0xff]
      %v626 = vld [vmem:[%s537 + $0xe8] sm:$0xff]
      %v627 = vld [vmem:[%s537 + $0xf0] sm:$0xff]
      %v628 = vld [vmem:[%s537 + $0xf8] sm:$0xff]
      %v629 = vld [vmem:[%s547] sm:$0xff]
      %v630 = vld [vmem:[%s547 + $0x8] sm:$0xff]
      %v631 = vld [vmem:[%s547 + $0x10] sm:$0xff]
      %v632 = vld [vmem:[%s547 + $0x18] sm:$0xff]
      %v633 = vld [vmem:[%s547 + $0x20] sm:$0xff]
      %v634 = vld [vmem:[%s547 + $0x28] sm:$0xff]
      %v635 = vld [vmem:[%s547 + $0x30] sm:$0xff]
      %v636 = vld [vmem:[%s547 + $0x38] sm:$0xff]
      %v637 = vld [vmem:[%s547 + $0x40] sm:$0xff]
      %v638 = vld [vmem:[%s547 + $0x48] sm:$0xff]
      %v639 = vld [vmem:[%s547 + $0x50] sm:$0xff]
      %v640 = vld [vmem:[%s547 + $0x58] sm:$0xff]
      %v641 = vld [vmem:[%s547 + $0x60] sm:$0xff]
      %v642 = vld [vmem:[%s547 + $0x68] sm:$0xff]
      %v643 = vld [vmem:[%s547 + $0x70] sm:$0xff]
      %v644 = vld [vmem:[%s547 + $0x78] sm:$0xff]
      %v645 = vld [vmem:[%s547 + $0x80] sm:$0xff]
      %v646 = vld [vmem:[%s547 + $0x88] sm:$0xff]
      %v647 = vld [vmem:[%s547 + $0x90] sm:$0xff]
      %v648 = vld [vmem:[%s547 + $0x98] sm:$0xff]
      %v649 = vld [vmem:[%s547 + $0xa0] sm:$0xff]
      %v650 = vld [vmem:[%s547 + $0xa8] sm:$0xff]
      %v651 = vld [vmem:[%s547 + $0xb0] sm:$0xff]
      %v652 = vld [vmem:[%s547 + $0xb8] sm:$0xff]
      %v653 = vld [vmem:[%s547 + $0xc0] sm:$0xff]
      %v654 = vld [vmem:[%s547 + $0xc8] sm:$0xff]
      %v655 = vld [vmem:[%s547 + $0xd0] sm:$0xff]
      %v656 = vld [vmem:[%s547 + $0xd8] sm:$0xff]
      %v657 = vld [vmem:[%s547 + $0xe0] sm:$0xff]
      %v658 = vld [vmem:[%s547 + $0xe8] sm:$0xff]
      %v659 = vld [vmem:[%s547 + $0xf0] sm:$0xff]
      %v660 = vld [vmem:[%s547 + $0xf8] sm:$0xff]
      %v661 = vmul.f32 %v564, %v564
      %vm662 = vcmask 253952
      %v663 = vsel %vm662, %v661, 0.0
      %664 = vadd.xlane.f32.xlu0 %v663
      %v665 = vpop.xlane.xlu0 %664
      %v666 = vrot.slane %v665, 4
      %v667 = vadd.f32 %v665, %v666
      %v668 = vrot.slane %v667, 2
      %v669 = vadd.f32 %v667, %v668
      %v670 = vrot.slane %v669, 1
      %v671 = vadd.f32 %v669, %v670
      %s672 = vtos %v671
      %v673 = vstv %s672
      %v674 = vrsqrt.pop %v673
      %v675 = vmul.f32 %v673, %v674
      %vm676 = vcmp.eq.f32.partialorder %v673, inf
      %v677 = vsel %vm676, %v673, %v675
      %vm678 = vcmp.eq.f32.partialorder %v673, 0.0
      %v679 = vand.u32 %v673, 2147483648
      %v680 = vsel %vm678, %v679, %v677
      %v681 = vadd.f32 %v680, 1e-08
      %v682 = vrcp.pop %v681
      %v683 = vmul.f32 %v564, %v682
      %v685 = vlaneseq
      %v686 = vshrl.u32 %v685, 7
      %v687 = vsub.s32 0, %v686
      %v688 = vrot.slane %v683, %v687
      %v690 = vmul.f32 %v565, %v688
      %v691 = vmul.f32 %v566, %v688
      %v692 = vmul.f32 %v567, %v688
      %v693 = vmul.f32 %v568, %v688
      %v694 = vmul.f32 %v569, %v688
      %v695 = vmul.f32 %v570, %v688
      %v696 = vmul.f32 %v571, %v688
      %v697 = vmul.f32 %v572, %v688
      %v698 = vmul.f32 %v573, %v688
      %v699 = vmul.f32 %v574, %v688
      %v700 = vmul.f32 %v575, %v688
      %v701 = vmul.f32 %v576, %v688
      %v702 = vmul.f32 %v577, %v688
      %v703 = vmul.f32 %v578, %v688
      %v704 = vmul.f32 %v579, %v688
      %v705 = vmul.f32 %v580, %v688
      %v706 = vmul.f32 %v581, %v688
      %v707 = vmul.f32 %v582, %v688
      %v708 = vmul.f32 %v583, %v688
      %v709 = vmul.f32 %v584, %v688
      %v710 = vmul.f32 %v585, %v688
      %v711 = vmul.f32 %v586, %v688
      %v712 = vmul.f32 %v587, %v688
      %v713 = vmul.f32 %v588, %v688
      %v714 = vmul.f32 %v589, %v688
      %v715 = vmul.f32 %v590, %v688
      %v716 = vmul.f32 %v591, %v688
      %v717 = vmul.f32 %v592, %v688
      %v718 = vmul.f32 %v593, %v688
      %v719 = vmul.f32 %v594, %v688
      %v720 = vmul.f32 %v595, %v688
      %v721 = vmul.f32 %v596, %v688
      %vm722 = vcmask 261120
      %v723 = vsel %vm722, %v690, 0.0
      %724 = vadd.xlane.f32.xlu0 %v723
      %v725 = vpop.xlane.xlu0 %724
      %v726 = vsel %vm722, %v691, 0.0
      %727 = vadd.xlane.f32.xlu0 %v726
      %v728 = vpop.xlane.xlu0 %727
      %v729 = vsel %vm722, %v692, 0.0
      %730 = vadd.xlane.f32.xlu0 %v729
      %v731 = vpop.xlane.xlu0 %730
      %v732 = vsel %vm722, %v693, 0.0
      %733 = vadd.xlane.f32.xlu0 %v732
      %v734 = vpop.xlane.xlu0 %733
      %v735 = vsel %vm722, %v694, 0.0
      %736 = vadd.xlane.f32.xlu0 %v735
      %v737 = vpop.xlane.xlu0 %736
      %v738 = vsel %vm722, %v695, 0.0
      %739 = vadd.xlane.f32.xlu0 %v738
      %v740 = vpop.xlane.xlu0 %739
      %v741 = vsel %vm722, %v696, 0.0
      %742 = vadd.xlane.f32.xlu0 %v741
      %v743 = vpop.xlane.xlu0 %742
      %v744 = vsel %vm722, %v697, 0.0
      %745 = vadd.xlane.f32.xlu0 %v744
      %v746 = vpop.xlane.xlu0 %745
      %v747 = vsel %vm722, %v698, 0.0
      %748 = vadd.xlane.f32.xlu0 %v747
      %v749 = vpop.xlane.xlu0 %748
      %v750 = vsel %vm722, %v699, 0.0
      %751 = vadd.xlane.f32.xlu0 %v750
      %v752 = vpop.xlane.xlu0 %751
      %v753 = vsel %vm722, %v700, 0.0
      %754 = vadd.xlane.f32.xlu0 %v753
      %v755 = vpop.xlane.xlu0 %754
      %v756 = vsel %vm722, %v701, 0.0
      %757 = vadd.xlane.f32.xlu0 %v756
      %v758 = vpop.xlane.xlu0 %757
      %v759 = vsel %vm722, %v702, 0.0
      %760 = vadd.xlane.f32.xlu0 %v759
      %v761 = vpop.xlane.xlu0 %760
      %v762 = vsel %vm722, %v703, 0.0
      %763 = vadd.xlane.f32.xlu0 %v762
      %v764 = vpop.xlane.xlu0 %763
      %v765 = vsel %vm722, %v704, 0.0
      %766 = vadd.xlane.f32.xlu0 %v765
      %v767 = vpop.xlane.xlu0 %766
      %v768 = vsel %vm722, %v705, 0.0
      %769 = vadd.xlane.f32.xlu0 %v768
      %v770 = vpop.xlane.xlu0 %769
      %v771 = vsel %vm722, %v706, 0.0
      %772 = vadd.xlane.f32.xlu0 %v771
      %v773 = vpop.xlane.xlu0 %772
      %v774 = vsel %vm722, %v707, 0.0
      %775 = vadd.xlane.f32.xlu0 %v774
      %v776 = vpop.xlane.xlu0 %775
      %v777 = vsel %vm722, %v708, 0.0
      %778 = vadd.xlane.f32.xlu0 %v777
      %v779 = vpop.xlane.xlu0 %778
      %v780 = vsel %vm722, %v709, 0.0
      %781 = vadd.xlane.f32.xlu0 %v780
      %v782 = vpop.xlane.xlu0 %781
      %v783 = vsel %vm722, %v710, 0.0
      %784 = vadd.xlane.f32.xlu0 %v783
      %v785 = vpop.xlane.xlu0 %784
      %v786 = vsel %vm722, %v711, 0.0
      %787 = vadd.xlane.f32.xlu0 %v786
      %v788 = vpop.xlane.xlu0 %787
      %v789 = vsel %vm722, %v712, 0.0
      %790 = vadd.xlane.f32.xlu0 %v789
      %v791 = vpop.xlane.xlu0 %790
      %v792 = vsel %vm722, %v713, 0.0
      %793 = vadd.xlane.f32.xlu0 %v792
      %v794 = vpop.xlane.xlu0 %793
      %v795 = vsel %vm722, %v714, 0.0
      %796 = vadd.xlane.f32.xlu0 %v795
      %v797 = vpop.xlane.xlu0 %796
      %v798 = vsel %vm722, %v715, 0.0
      %799 = vadd.xlane.f32.xlu0 %v798
      %v800 = vpop.xlane.xlu0 %799
      %v801 = vsel %vm722, %v716, 0.0
      %802 = vadd.xlane.f32.xlu0 %v801
      %v803 = vpop.xlane.xlu0 %802
      %v804 = vsel %vm722, %v717, 0.0
      %805 = vadd.xlane.f32.xlu0 %v804
      %v806 = vpop.xlane.xlu0 %805
      %v807 = vsel %vm722, %v718, 0.0
      %808 = vadd.xlane.f32.xlu0 %v807
      %v809 = vpop.xlane.xlu0 %808
      %v810 = vsel %vm722, %v719, 0.0
      %811 = vadd.xlane.f32.xlu0 %v810
      %v812 = vpop.xlane.xlu0 %811
      %v813 = vsel %vm722, %v720, 0.0
      %814 = vadd.xlane.f32.xlu0 %v813
      %v815 = vpop.xlane.xlu0 %814
      %v816 = vsel %vm722, %v721, 0.0
      %817 = vadd.xlane.f32.xlu0 %v816
      %v818 = vpop.xlane.xlu0 %817
      %v819 = vmul.f32 %v565, %v565
      %v820 = vmul.f32 %v566, %v566
      %v821 = vmul.f32 %v567, %v567
      %v822 = vmul.f32 %v568, %v568
      %v823 = vmul.f32 %v569, %v569
      %v824 = vmul.f32 %v570, %v570
      %v825 = vmul.f32 %v571, %v571
      %v826 = vmul.f32 %v572, %v572
      %v827 = vmul.f32 %v573, %v573
      %v828 = vmul.f32 %v574, %v574
      %v829 = vmul.f32 %v575, %v575
      %v830 = vmul.f32 %v576, %v576
      %v831 = vmul.f32 %v577, %v577
      %v832 = vmul.f32 %v578, %v578
      %v833 = vmul.f32 %v579, %v579
      %v834 = vmul.f32 %v580, %v580
      %v835 = vmul.f32 %v581, %v581
      %v836 = vmul.f32 %v582, %v582
      %v837 = vmul.f32 %v583, %v583
      %v838 = vmul.f32 %v584, %v584
      %v839 = vmul.f32 %v585, %v585
      %v840 = vmul.f32 %v586, %v586
      %v841 = vmul.f32 %v587, %v587
      %v842 = vmul.f32 %v588, %v588
      %v843 = vmul.f32 %v589, %v589
      %v844 = vmul.f32 %v590, %v590
      %v845 = vmul.f32 %v591, %v591
      %v846 = vmul.f32 %v592, %v592
      %v847 = vmul.f32 %v593, %v593
      %v848 = vmul.f32 %v594, %v594
      %v849 = vmul.f32 %v595, %v595
      %v850 = vmul.f32 %v596, %v596
      %v851 = vsel %vm722, %v819, 0.0
      %852 = vadd.xlane.f32.xlu0 %v851
      %v853 = vpop.xlane.xlu0 %852
      %v854 = vsel %vm722, %v820, 0.0
      %855 = vadd.xlane.f32.xlu0 %v854
      %v856 = vpop.xlane.xlu0 %855
      %v857 = vsel %vm722, %v821, 0.0
      %858 = vadd.xlane.f32.xlu0 %v857
      %v859 = vpop.xlane.xlu0 %858
      %v860 = vsel %vm722, %v822, 0.0
      %861 = vadd.xlane.f32.xlu0 %v860
      %v862 = vpop.xlane.xlu0 %861
      %v863 = vsel %vm722, %v823, 0.0
      %864 = vadd.xlane.f32.xlu0 %v863
      %v865 = vpop.xlane.xlu0 %864
      %v866 = vsel %vm722, %v824, 0.0
      %867 = vadd.xlane.f32.xlu0 %v866
      %v868 = vpop.xlane.xlu0 %867
      %v869 = vsel %vm722, %v825, 0.0
      %870 = vadd.xlane.f32.xlu0 %v869
      %v871 = vpop.xlane.xlu0 %870
      %v872 = vsel %vm722, %v826, 0.0
      %873 = vadd.xlane.f32.xlu0 %v872
      %v874 = vpop.xlane.xlu0 %873
      %v875 = vsel %vm722, %v827, 0.0
      %876 = vadd.xlane.f32.xlu0 %v875
      %v877 = vpop.xlane.xlu0 %876
      %v878 = vsel %vm722, %v828, 0.0
      %879 = vadd.xlane.f32.xlu0 %v878
      %v880 = vpop.xlane.xlu0 %879
      %v881 = vsel %vm722, %v829, 0.0
      %882 = vadd.xlane.f32.xlu0 %v881
      %v883 = vpop.xlane.xlu0 %882
      %v884 = vsel %vm722, %v830, 0.0
      %885 = vadd.xlane.f32.xlu0 %v884
      %v886 = vpop.xlane.xlu0 %885
      %v887 = vsel %vm722, %v831, 0.0
      %888 = vadd.xlane.f32.xlu0 %v887
      %v889 = vpop.xlane.xlu0 %888
      %v890 = vsel %vm722, %v832, 0.0
      %891 = vadd.xlane.f32.xlu0 %v890
      %v892 = vpop.xlane.xlu0 %891
      %v893 = vsel %vm722, %v833, 0.0
      %894 = vadd.xlane.f32.xlu0 %v893
      %v895 = vpop.xlane.xlu0 %894
      %v896 = vsel %vm722, %v834, 0.0
      %897 = vadd.xlane.f32.xlu0 %v896
      %v898 = vpop.xlane.xlu0 %897
      %v899 = vsel %vm722, %v835, 0.0
      %900 = vadd.xlane.f32.xlu0 %v899
      %v901 = vpop.xlane.xlu0 %900
      %v902 = vsel %vm722, %v836, 0.0
      %903 = vadd.xlane.f32.xlu0 %v902
      %v904 = vpop.xlane.xlu0 %903
      %v905 = vsel %vm722, %v837, 0.0
      %906 = vadd.xlane.f32.xlu0 %v905
      %v907 = vpop.xlane.xlu0 %906
      %v908 = vsel %vm722, %v838, 0.0
      %909 = vadd.xlane.f32.xlu0 %v908
      %v910 = vpop.xlane.xlu0 %909
      %v911 = vsel %vm722, %v839, 0.0
      %912 = vadd.xlane.f32.xlu0 %v911
      %v913 = vpop.xlane.xlu0 %912
      %v914 = vsel %vm722, %v840, 0.0
      %915 = vadd.xlane.f32.xlu0 %v914
      %v916 = vpop.xlane.xlu0 %915
      %v917 = vsel %vm722, %v841, 0.0
      %918 = vadd.xlane.f32.xlu0 %v917
      %v919 = vpop.xlane.xlu0 %918
      %v920 = vsel %vm722, %v842, 0.0
      %921 = vadd.xlane.f32.xlu0 %v920
      %v922 = vpop.xlane.xlu0 %921
      %v923 = vsel %vm722, %v843, 0.0
      %924 = vadd.xlane.f32.xlu0 %v923
      %v925 = vpop.xlane.xlu0 %924
      %v926 = vsel %vm722, %v844, 0.0
      %927 = vadd.xlane.f32.xlu0 %v926
      %v928 = vpop.xlane.xlu0 %927
      %v929 = vsel %vm722, %v845, 0.0
      %930 = vadd.xlane.f32.xlu0 %v929
      %v931 = vpop.xlane.xlu0 %930
      %v932 = vsel %vm722, %v846, 0.0
      %933 = vadd.xlane.f32.xlu0 %v932
      %v934 = vpop.xlane.xlu0 %933
      %v935 = vsel %vm722, %v847, 0.0
      %936 = vadd.xlane.f32.xlu0 %v935
      %v937 = vpop.xlane.xlu0 %936
      %v938 = vsel %vm722, %v848, 0.0
      %939 = vadd.xlane.f32.xlu0 %v938
      %v940 = vpop.xlane.xlu0 %939
      %v941 = vsel %vm722, %v849, 0.0
      %942 = vadd.xlane.f32.xlu0 %v941
      %v943 = vpop.xlane.xlu0 %942
      %v944 = vsel %vm722, %v850, 0.0
      %945 = vadd.xlane.f32.xlu0 %v944
      %v946 = vpop.xlane.xlu0 %945
      %v947 = vrsqrt.pop %v853
      %v948 = vmul.f32 %v853, %v947
      %vm949 = vcmp.eq.f32.partialorder %v853, inf
      %v950 = vsel %vm949, %v853, %v948
      %vm951 = vcmp.eq.f32.partialorder %v853, 0.0
      %v952 = vand.u32 %v853, 2147483648
      %v953 = vsel %vm951, %v952, %v950
      %v954 = vrsqrt.pop %v856
      %v955 = vmul.f32 %v856, %v954
      %vm956 = vcmp.eq.f32.partialorder %v856, inf
      %v957 = vsel %vm956, %v856, %v955
      %vm958 = vcmp.eq.f32.partialorder %v856, 0.0
      %v959 = vand.u32 %v856, 2147483648
      %v960 = vsel %vm958, %v959, %v957
      %v961 = vrsqrt.pop %v859
      %v962 = vmul.f32 %v859, %v961
      %vm963 = vcmp.eq.f32.partialorder %v859, inf
      %v964 = vsel %vm963, %v859, %v962
      %vm965 = vcmp.eq.f32.partialorder %v859, 0.0
      %v966 = vand.u32 %v859, 2147483648
      %v967 = vsel %vm965, %v966, %v964
      %v968 = vrsqrt.pop %v862
      %v969 = vmul.f32 %v862, %v968
      %vm970 = vcmp.eq.f32.partialorder %v862, inf
      %v971 = vsel %vm970, %v862, %v969
      %vm972 = vcmp.eq.f32.partialorder %v862, 0.0
      %v973 = vand.u32 %v862, 2147483648
      %v974 = vsel %vm972, %v973, %v971
      %v975 = vrsqrt.pop %v865
      %v976 = vmul.f32 %v865, %v975
      %vm977 = vcmp.eq.f32.partialorder %v865, inf
      %v978 = vsel %vm977, %v865, %v976
      %vm979 = vcmp.eq.f32.partialorder %v865, 0.0
      %v980 = vand.u32 %v865, 2147483648
      %v981 = vsel %vm979, %v980, %v978
      %v982 = vrsqrt.pop %v868
      %v983 = vmul.f32 %v868, %v982
      %vm984 = vcmp.eq.f32.partialorder %v868, inf
      %v985 = vsel %vm984, %v868, %v983
      %vm986 = vcmp.eq.f32.partialorder %v868, 0.0
      %v987 = vand.u32 %v868, 2147483648
      %v988 = vsel %vm986, %v987, %v985
      %v989 = vrsqrt.pop %v871
      %v990 = vmul.f32 %v871, %v989
      %vm991 = vcmp.eq.f32.partialorder %v871, inf
      %v992 = vsel %vm991, %v871, %v990
      %vm993 = vcmp.eq.f32.partialorder %v871, 0.0
      %v994 = vand.u32 %v871, 2147483648
      %v995 = vsel %vm993, %v994, %v992
      %v996 = vrsqrt.pop %v874
      %v997 = vmul.f32 %v874, %v996
      %vm998 = vcmp.eq.f32.partialorder %v874, inf
      %v999 = vsel %vm998, %v874, %v997
      %vm1000 = vcmp.eq.f32.partialorder %v874, 0.0
      %v1001 = vand.u32 %v874, 2147483648
      %v1002 = vsel %vm1000, %v1001, %v999
      %v1003 = vrsqrt.pop %v877
      %v1004 = vmul.f32 %v877, %v1003
      %vm1005 = vcmp.eq.f32.partialorder %v877, inf
      %v1006 = vsel %vm1005, %v877, %v1004
      %vm1007 = vcmp.eq.f32.partialorder %v877, 0.0
      %v1008 = vand.u32 %v877, 2147483648
      %v1009 = vsel %vm1007, %v1008, %v1006
      %v1010 = vrsqrt.pop %v880
      %v1011 = vmul.f32 %v880, %v1010
      %vm1012 = vcmp.eq.f32.partialorder %v880, inf
      %v1013 = vsel %vm1012, %v880, %v1011
      %vm1014 = vcmp.eq.f32.partialorder %v880, 0.0
      %v1015 = vand.u32 %v880, 2147483648
      %v1016 = vsel %vm1014, %v1015, %v1013
      %v1017 = vrsqrt.pop %v883
      %v1018 = vmul.f32 %v883, %v1017
      %vm1019 = vcmp.eq.f32.partialorder %v883, inf
      %v1020 = vsel %vm1019, %v883, %v1018
      %vm1021 = vcmp.eq.f32.partialorder %v883, 0.0
      %v1022 = vand.u32 %v883, 2147483648
      %v1023 = vsel %vm1021, %v1022, %v1020
      %v1024 = vrsqrt.pop %v886
      %v1025 = vmul.f32 %v886, %v1024
      %vm1026 = vcmp.eq.f32.partialorder %v886, inf
      %v1027 = vsel %vm1026, %v886, %v1025
      %vm1028 = vcmp.eq.f32.partialorder %v886, 0.0
      %v1029 = vand.u32 %v886, 2147483648
      %v1030 = vsel %vm1028, %v1029, %v1027
      %v1031 = vrsqrt.pop %v889
      %v1032 = vmul.f32 %v889, %v1031
      %vm1033 = vcmp.eq.f32.partialorder %v889, inf
      %v1034 = vsel %vm1033, %v889, %v1032
      %vm1035 = vcmp.eq.f32.partialorder %v889, 0.0
      %v1036 = vand.u32 %v889, 2147483648
      %v1037 = vsel %vm1035, %v1036, %v1034
      %v1038 = vrsqrt.pop %v892
      %v1039 = vmul.f32 %v892, %v1038
      %vm1040 = vcmp.eq.f32.partialorder %v892, inf
      %v1041 = vsel %vm1040, %v892, %v1039
      %vm1042 = vcmp.eq.f32.partialorder %v892, 0.0
      %v1043 = vand.u32 %v892, 2147483648
      %v1044 = vsel %vm1042, %v1043, %v1041
      %v1045 = vrsqrt.pop %v895
      %v1046 = vmul.f32 %v895, %v1045
      %vm1047 = vcmp.eq.f32.partialorder %v895, inf
      %v1048 = vsel %vm1047, %v895, %v1046
      %vm1049 = vcmp.eq.f32.partialorder %v895, 0.0
      %v1050 = vand.u32 %v895, 2147483648
      %v1051 = vsel %vm1049, %v1050, %v1048
      %v1052 = vrsqrt.pop %v898
      %v1053 = vmul.f32 %v898, %v1052
      %vm1054 = vcmp.eq.f32.partialorder %v898, inf
      %v1055 = vsel %vm1054, %v898, %v1053
      %vm1056 = vcmp.eq.f32.partialorder %v898, 0.0
      %v1057 = vand.u32 %v898, 2147483648
      %v1058 = vsel %vm1056, %v1057, %v1055
      %v1059 = vrsqrt.pop %v901
      %v1060 = vmul.f32 %v901, %v1059
      %vm1061 = vcmp.eq.f32.partialorder %v901, inf
      %v1062 = vsel %vm1061, %v901, %v1060
      %vm1063 = vcmp.eq.f32.partialorder %v901, 0.0
      %v1064 = vand.u32 %v901, 2147483648
      %v1065 = vsel %vm1063, %v1064, %v1062
      %v1066 = vrsqrt.pop %v904
      %v1067 = vmul.f32 %v904, %v1066
      %vm1068 = vcmp.eq.f32.partialorder %v904, inf
      %v1069 = vsel %vm1068, %v904, %v1067
      %vm1070 = vcmp.eq.f32.partialorder %v904, 0.0
      %v1071 = vand.u32 %v904, 2147483648
      %v1072 = vsel %vm1070, %v1071, %v1069
      %v1073 = vrsqrt.pop %v907
      %v1074 = vmul.f32 %v907, %v1073
      %vm1075 = vcmp.eq.f32.partialorder %v907, inf
      %v1076 = vsel %vm1075, %v907, %v1074
      %vm1077 = vcmp.eq.f32.partialorder %v907, 0.0
      %v1078 = vand.u32 %v907, 2147483648
      %v1079 = vsel %vm1077, %v1078, %v1076
      %v1080 = vrsqrt.pop %v910
      %v1081 = vmul.f32 %v910, %v1080
      %vm1082 = vcmp.eq.f32.partialorder %v910, inf
      %v1083 = vsel %vm1082, %v910, %v1081
      %vm1084 = vcmp.eq.f32.partialorder %v910, 0.0
      %v1085 = vand.u32 %v910, 2147483648
      %v1086 = vsel %vm1084, %v1085, %v1083
      %v1087 = vrsqrt.pop %v913
      %v1088 = vmul.f32 %v913, %v1087
      %vm1089 = vcmp.eq.f32.partialorder %v913, inf
      %v1090 = vsel %vm1089, %v913, %v1088
      %vm1091 = vcmp.eq.f32.partialorder %v913, 0.0
      %v1092 = vand.u32 %v913, 2147483648
      %v1093 = vsel %vm1091, %v1092, %v1090
      %v1094 = vrsqrt.pop %v916
      %v1095 = vmul.f32 %v916, %v1094
      %vm1096 = vcmp.eq.f32.partialorder %v916, inf
      %v1097 = vsel %vm1096, %v916, %v1095
      %vm1098 = vcmp.eq.f32.partialorder %v916, 0.0
      %v1099 = vand.u32 %v916, 2147483648
      %v1100 = vsel %vm1098, %v1099, %v1097
      %v1101 = vrsqrt.pop %v919
      %v1102 = vmul.f32 %v919, %v1101
      %vm1103 = vcmp.eq.f32.partialorder %v919, inf
      %v1104 = vsel %vm1103, %v919, %v1102
      %vm1105 = vcmp.eq.f32.partialorder %v919, 0.0
      %v1106 = vand.u32 %v919, 2147483648
      %v1107 = vsel %vm1105, %v1106, %v1104
      %v1108 = vrsqrt.pop %v922
      %v1109 = vmul.f32 %v922, %v1108
      %vm1110 = vcmp.eq.f32.partialorder %v922, inf
      %v1111 = vsel %vm1110, %v922, %v1109
      %vm1112 = vcmp.eq.f32.partialorder %v922, 0.0
      %v1113 = vand.u32 %v922, 2147483648
      %v1114 = vsel %vm1112, %v1113, %v1111
      %v1115 = vrsqrt.pop %v925
      %v1116 = vmul.f32 %v925, %v1115
      %vm1117 = vcmp.eq.f32.partialorder %v925, inf
      %v1118 = vsel %vm1117, %v925, %v1116
      %vm1119 = vcmp.eq.f32.partialorder %v925, 0.0
      %v1120 = vand.u32 %v925, 2147483648
      %v1121 = vsel %vm1119, %v1120, %v1118
      %v1122 = vrsqrt.pop %v928
      %v1123 = vmul.f32 %v928, %v1122
      %vm1124 = vcmp.eq.f32.partialorder %v928, inf
      %v1125 = vsel %vm1124, %v928, %v1123
      %vm1126 = vcmp.eq.f32.partialorder %v928, 0.0
      %v1127 = vand.u32 %v928, 2147483648
      %v1128 = vsel %vm1126, %v1127, %v1125
      %v1129 = vrsqrt.pop %v931
      %v1130 = vmul.f32 %v931, %v1129
      %vm1131 = vcmp.eq.f32.partialorder %v931, inf
      %v1132 = vsel %vm1131, %v931, %v1130
      %vm1133 = vcmp.eq.f32.partialorder %v931, 0.0
      %v1134 = vand.u32 %v931, 2147483648
      %v1135 = vsel %vm1133, %v1134, %v1132
      %v1136 = vrsqrt.pop %v934
      %v1137 = vmul.f32 %v934, %v1136
      %vm1138 = vcmp.eq.f32.partialorder %v934, inf
      %v1139 = vsel %vm1138, %v934, %v1137
      %vm1140 = vcmp.eq.f32.partialorder %v934, 0.0
      %v1141 = vand.u32 %v934, 2147483648
      %v1142 = vsel %vm1140, %v1141, %v1139
      %v1143 = vrsqrt.pop %v937
      %v1144 = vmul.f32 %v937, %v1143
      %vm1145 = vcmp.eq.f32.partialorder %v937, inf
      %v1146 = vsel %vm1145, %v937, %v1144
      %vm1147 = vcmp.eq.f32.partialorder %v937, 0.0
      %v1148 = vand.u32 %v937, 2147483648
      %v1149 = vsel %vm1147, %v1148, %v1146
      %v1150 = vrsqrt.pop %v940
      %v1151 = vmul.f32 %v940, %v1150
      %vm1152 = vcmp.eq.f32.partialorder %v940, inf
      %v1153 = vsel %vm1152, %v940, %v1151
      %vm1154 = vcmp.eq.f32.partialorder %v940, 0.0
      %v1155 = vand.u32 %v940, 2147483648
      %v1156 = vsel %vm1154, %v1155, %v1153
      %v1157 = vrsqrt.pop %v943
      %v1158 = vmul.f32 %v943, %v1157
      %vm1159 = vcmp.eq.f32.partialorder %v943, inf
      %v1160 = vsel %vm1159, %v943, %v1158
      %vm1161 = vcmp.eq.f32.partialorder %v943, 0.0
      %v1162 = vand.u32 %v943, 2147483648
      %v1163 = vsel %vm1161, %v1162, %v1160
      %v1164 = vrsqrt.pop %v946
      %v1165 = vmul.f32 %v946, %v1164
      %vm1166 = vcmp.eq.f32.partialorder %v946, inf
      %v1167 = vsel %vm1166, %v946, %v1165
      %vm1168 = vcmp.eq.f32.partialorder %v946, 0.0
      %v1169 = vand.u32 %v946, 2147483648
      %v1170 = vsel %vm1168, %v1169, %v1167
      %vm1171 = vcmp.gt.f32.partialorder %v953, 0.0
      %vm1172 = vcmp.gt.f32.partialorder %v960, 0.0
      %vm1173 = vcmp.gt.f32.partialorder %v967, 0.0
      %vm1174 = vcmp.gt.f32.partialorder %v974, 0.0
      %vm1175 = vcmp.gt.f32.partialorder %v981, 0.0
      %vm1176 = vcmp.gt.f32.partialorder %v988, 0.0
      %vm1177 = vcmp.gt.f32.partialorder %v995, 0.0
      %vm1178 = vcmp.gt.f32.partialorder %v1002, 0.0
      %vm1179 = vcmp.gt.f32.partialorder %v1009, 0.0
      %vm1180 = vcmp.gt.f32.partialorder %v1016, 0.0
      %vm1181 = vcmp.gt.f32.partialorder %v1023, 0.0
      %vm1182 = vcmp.gt.f32.partialorder %v1030, 0.0
      %vm1183 = vcmp.gt.f32.partialorder %v1037, 0.0
      %vm1184 = vcmp.gt.f32.partialorder %v1044, 0.0
      %vm1185 = vcmp.gt.f32.partialorder %v1051, 0.0
      %vm1186 = vcmp.gt.f32.partialorder %v1058, 0.0
      %vm1187 = vcmp.gt.f32.partialorder %v1065, 0.0
      %vm1188 = vcmp.gt.f32.partialorder %v1072, 0.0
      %vm1189 = vcmp.gt.f32.partialorder %v1079, 0.0
      %vm1190 = vcmp.gt.f32.partialorder %v1086, 0.0
      %vm1191 = vcmp.gt.f32.partialorder %v1093, 0.0
      %vm1192 = vcmp.gt.f32.partialorder %v1100, 0.0
      %vm1193 = vcmp.gt.f32.partialorder %v1107, 0.0
      %vm1194 = vcmp.gt.f32.partialorder %v1114, 0.0
      %vm1195 = vcmp.gt.f32.partialorder %v1121, 0.0
      %vm1196 = vcmp.gt.f32.partialorder %v1128, 0.0
      %vm1197 = vcmp.gt.f32.partialorder %v1135, 0.0
      %vm1198 = vcmp.gt.f32.partialorder %v1142, 0.0
      %vm1199 = vcmp.gt.f32.partialorder %v1149, 0.0
      %vm1200 = vcmp.gt.f32.partialorder %v1156, 0.0
      %vm1201 = vcmp.gt.f32.partialorder %v1163, 0.0
      %vm1202 = vcmp.gt.f32.partialorder %v1170, 0.0
      %v1203 = vsel %vm1171, %v953, 1.0
      %v1204 = vsel %vm1172, %v960, 1.0
      %v1205 = vsel %vm1173, %v967, 1.0
      %v1206 = vsel %vm1174, %v974, 1.0
      %v1207 = vsel %vm1175, %v981, 1.0
      %v1208 = vsel %vm1176, %v988, 1.0
      %v1209 = vsel %vm1177, %v995, 1.0
      %v1210 = vsel %vm1178, %v1002, 1.0
      %v1211 = vsel %vm1179, %v1009, 1.0
      %v1212 = vsel %vm1180, %v1016, 1.0
      %v1213 = vsel %vm1181, %v1023, 1.0
      %v1214 = vsel %vm1182, %v1030, 1.0
      %v1215 = vsel %vm1183, %v1037, 1.0
      %v1216 = vsel %vm1184, %v1044, 1.0
      %v1217 = vsel %vm1185, %v1051, 1.0
      %v1218 = vsel %vm1186, %v1058, 1.0
      %v1219 = vsel %vm1187, %v1065, 1.0
      %v1220 = vsel %vm1188, %v1072, 1.0
      %v1221 = vsel %vm1189, %v1079, 1.0
      %v1222 = vsel %vm1190, %v1086, 1.0
      %v1223 = vsel %vm1191, %v1093, 1.0
      %v1224 = vsel %vm1192, %v1100, 1.0
      %v1225 = vsel %vm1193, %v1107, 1.0
      %v1226 = vsel %vm1194, %v1114, 1.0
      %v1227 = vsel %vm1195, %v1121, 1.0
      %v1228 = vsel %vm1196, %v1128, 1.0
      %v1229 = vsel %vm1197, %v1135, 1.0
      %v1230 = vsel %vm1198, %v1142, 1.0
      %v1231 = vsel %vm1199, %v1149, 1.0
      %v1232 = vsel %vm1200, %v1156, 1.0
      %v1233 = vsel %vm1201, %v1163, 1.0
      %v1234 = vsel %vm1202, %v1170, 1.0
      %v1235 = vrcp.pop %v1203
      %v1236 = vmul.f32 %v725, %v1235
      %v1237 = vrcp.pop %v1204
      %v1238 = vmul.f32 %v728, %v1237
      %v1239 = vrcp.pop %v1205
      %v1240 = vmul.f32 %v731, %v1239
      %v1241 = vrcp.pop %v1206
      %v1242 = vmul.f32 %v734, %v1241
      %v1243 = vrcp.pop %v1207
      %v1244 = vmul.f32 %v737, %v1243
      %v1245 = vrcp.pop %v1208
      %v1246 = vmul.f32 %v740, %v1245
      %v1247 = vrcp.pop %v1209
      %v1248 = vmul.f32 %v743, %v1247
      %v1249 = vrcp.pop %v1210
      %v1250 = vmul.f32 %v746, %v1249
      %v1251 = vrcp.pop %v1211
      %v1252 = vmul.f32 %v749, %v1251
      %v1253 = vrcp.pop %v1212
      %v1254 = vmul.f32 %v752, %v1253
      %v1255 = vrcp.pop %v1213
      %v1256 = vmul.f32 %v755, %v1255
      %v1257 = vrcp.pop %v1214
      %v1258 = vmul.f32 %v758, %v1257
      %v1259 = vrcp.pop %v1215
      %v1260 = vmul.f32 %v761, %v1259
      %v1261 = vrcp.pop %v1216
      %v1262 = vmul.f32 %v764, %v1261
      %v1263 = vrcp.pop %v1217
      %v1264 = vmul.f32 %v767, %v1263
      %v1265 = vrcp.pop %v1218
      %v1266 = vmul.f32 %v770, %v1265
      %v1267 = vrcp.pop %v1219
      %v1268 = vmul.f32 %v773, %v1267
      %v1269 = vrcp.pop %v1220
      %v1270 = vmul.f32 %v776, %v1269
      %v1271 = vrcp.pop %v1221
      %v1272 = vmul.f32 %v779, %v1271
      %v1273 = vrcp.pop %v1222
      %v1274 = vmul.f32 %v782, %v1273
      %v1275 = vrcp.pop %v1223
      %v1276 = vmul.f32 %v785, %v1275
      %v1277 = vrcp.pop %v1224
      %v1278 = vmul.f32 %v788, %v1277
      %v1279 = vrcp.pop %v1225
      %v1280 = vmul.f32 %v791, %v1279
      %v1281 = vrcp.pop %v1226
      %v1282 = vmul.f32 %v794, %v1281
      %v1283 = vrcp.pop %v1227
      %v1284 = vmul.f32 %v797, %v1283
      %v1285 = vrcp.pop %v1228
      %v1286 = vmul.f32 %v800, %v1285
      %v1287 = vrcp.pop %v1229
      %v1288 = vmul.f32 %v803, %v1287
      %v1289 = vrcp.pop %v1230
      %v1290 = vmul.f32 %v806, %v1289
      %v1291 = vrcp.pop %v1231
      %v1292 = vmul.f32 %v809, %v1291
      %v1293 = vrcp.pop %v1232
      %v1294 = vmul.f32 %v812, %v1293
      %v1295 = vrcp.pop %v1233
      %v1296 = vmul.f32 %v815, %v1295
      %v1297 = vrcp.pop %v1234
      %v1298 = vmul.f32 %v818, %v1297
      %v1299 = vmul.f32 %v1236, 1.442695
      %v1300 = vpow.pop %v1299
      %v1301 = vmul.f32 %v1238, 1.442695
      %v1302 = vpow.pop %v1301
      %v1303 = vmul.f32 %v1240, 1.442695
      %v1304 = vpow.pop %v1303
      %v1305 = vmul.f32 %v1242, 1.442695
      %v1306 = vpow.pop %v1305
      %v1307 = vmul.f32 %v1244, 1.442695
      %v1308 = vpow.pop %v1307
      %v1309 = vmul.f32 %v1246, 1.442695
      %v1310 = vpow.pop %v1309
      %v1311 = vmul.f32 %v1248, 1.442695
      %v1312 = vpow.pop %v1311
      %v1313 = vmul.f32 %v1250, 1.442695
      %v1314 = vpow.pop %v1313
      %v1315 = vmul.f32 %v1252, 1.442695
      %v1316 = vpow.pop %v1315
      %v1317 = vmul.f32 %v1254, 1.442695
      %v1318 = vpow.pop %v1317
      %v1319 = vmul.f32 %v1256, 1.442695
      %v1320 = vpow.pop %v1319
      %v1321 = vmul.f32 %v1258, 1.442695
      %v1322 = vpow.pop %v1321
      %v1323 = vmul.f32 %v1260, 1.442695
      %v1324 = vpow.pop %v1323
      %v1325 = vmul.f32 %v1262, 1.442695
      %v1326 = vpow.pop %v1325
      %v1327 = vmul.f32 %v1264, 1.442695
      %v1328 = vpow.pop %v1327
      %v1329 = vmul.f32 %v1266, 1.442695
      %v1330 = vpow.pop %v1329
      %v1331 = vmul.f32 %v1268, 1.442695
      %v1332 = vpow.pop %v1331
      %v1333 = vmul.f32 %v1270, 1.442695
      %v1334 = vpow.pop %v1333
      %v1335 = vmul.f32 %v1272, 1.442695
      %v1336 = vpow.pop %v1335
      %v1337 = vmul.f32 %v1274, 1.442695
      %v1338 = vpow.pop %v1337
      %v1339 = vmul.f32 %v1276, 1.442695
      %v1340 = vpow.pop %v1339
      %v1341 = vmul.f32 %v1278, 1.442695
      %v1342 = vpow.pop %v1341
      %v1343 = vmul.f32 %v1280, 1.442695
      %v1344 = vpow.pop %v1343
      %v1345 = vmul.f32 %v1282, 1.442695
      %v1346 = vpow.pop %v1345
      %v1347 = vmul.f32 %v1284, 1.442695
      %v1348 = vpow.pop %v1347
      %v1349 = vmul.f32 %v1286, 1.442695
      %v1350 = vpow.pop %v1349
      %v1351 = vmul.f32 %v1288, 1.442695
      %v1352 = vpow.pop %v1351
      %v1353 = vmul.f32 %v1290, 1.442695
      %v1354 = vpow.pop %v1353
      %v1355 = vmul.f32 %v1292, 1.442695
      %v1356 = vpow.pop %v1355
      %v1357 = vmul.f32 %v1294, 1.442695
      %v1358 = vpow.pop %v1357
      %v1359 = vmul.f32 %v1296, 1.442695
      %v1360 = vpow.pop %v1359
      %v1361 = vmul.f32 %v1298, 1.442695
      %v1362 = vpow.pop %v1361
      %v1363 = vld [vmem:[#allocation2] sm:$0x1]
      %v1364 = vmul.f32 %v1300, %v597
      %v1365 = vmul.f32 %v1302, %v598
      %v1366 = vmul.f32 %v1304, %v599
      %v1367 = vmul.f32 %v1306, %v600
      %v1368 = vmul.f32 %v1308, %v601
      %v1369 = vmul.f32 %v1310, %v602
      %v1370 = vmul.f32 %v1312, %v603
      %v1371 = vmul.f32 %v1314, %v604
      %v1372 = vmul.f32 %v1316, %v605
      %v1373 = vmul.f32 %v1318, %v606
      %v1374 = vmul.f32 %v1320, %v607
      %v1375 = vmul.f32 %v1322, %v608
      %v1376 = vmul.f32 %v1324, %v609
      %v1377 = vmul.f32 %v1326, %v610
      %v1378 = vmul.f32 %v1328, %v611
      %v1379 = vmul.f32 %v1330, %v612
      %v1380 = vmul.f32 %v1332, %v613
      %v1381 = vmul.f32 %v1334, %v614
      %v1382 = vmul.f32 %v1336, %v615
      %v1383 = vmul.f32 %v1338, %v616
      %v1384 = vmul.f32 %v1340, %v617
      %v1385 = vmul.f32 %v1342, %v618
      %v1386 = vmul.f32 %v1344, %v619
      %v1387 = vmul.f32 %v1346, %v620
      %v1388 = vmul.f32 %v1348, %v621
      %v1389 = vmul.f32 %v1350, %v622
      %v1390 = vmul.f32 %v1352, %v623
      %v1391 = vmul.f32 %v1354, %v624
      %v1392 = vmul.f32 %v1356, %v625
      %v1393 = vmul.f32 %v1358, %v626
      %v1394 = vmul.f32 %v1360, %v627
      %v1395 = vmul.f32 %v1362, %v628
      %vm1396 = vcmask 7168
      %v1397 = vsel %vm1396, %v1364, 0.0
      %v1398 = vsel %vm1396, %v1365, 0.0
      %v1399 = vadd.f32 %v1397, %v1398
      %v1400 = vsel %vm1396, %v1366, 0.0
      %v1401 = vadd.f32 %v1399, %v1400
      %v1402 = vsel %vm1396, %v1367, 0.0
      %v1403 = vadd.f32 %v1401, %v1402
      %v1404 = vsel %vm1396, %v1368, 0.0
      %v1405 = vadd.f32 %v1403, %v1404
      %v1406 = vsel %vm1396, %v1369, 0.0
      %v1407 = vadd.f32 %v1405, %v1406
      %v1408 = vsel %vm1396, %v1370, 0.0
      %v1409 = vadd.f32 %v1407, %v1408
      %v1410 = vsel %vm1396, %v1371, 0.0
      %v1411 = vadd.f32 %v1409, %v1410
      %v1412 = vsel %vm1396, %v1372, 0.0
      %v1413 = vadd.f32 %v1411, %v1412
      %v1414 = vsel %vm1396, %v1373, 0.0
      %v1415 = vadd.f32 %v1413, %v1414
      %v1416 = vsel %vm1396, %v1374, 0.0
      %v1417 = vadd.f32 %v1415, %v1416
      %v1418 = vsel %vm1396, %v1375, 0.0
      %v1419 = vadd.f32 %v1417, %v1418
      %v1420 = vsel %vm1396, %v1376, 0.0
      %v1421 = vadd.f32 %v1419, %v1420
      %v1422 = vsel %vm1396, %v1377, 0.0
      %v1423 = vadd.f32 %v1421, %v1422
      %v1424 = vsel %vm1396, %v1378, 0.0
      %v1425 = vadd.f32 %v1423, %v1424
      %v1426 = vsel %vm1396, %v1379, 0.0
      %v1427 = vadd.f32 %v1425, %v1426
      %v1428 = vsel %vm1396, %v1380, 0.0
      %v1429 = vadd.f32 %v1427, %v1428
      %v1430 = vsel %vm1396, %v1381, 0.0
      %v1431 = vadd.f32 %v1429, %v1430
      %v1432 = vsel %vm1396, %v1382, 0.0
      %v1433 = vadd.f32 %v1431, %v1432
      %v1434 = vsel %vm1396, %v1383, 0.0
      %v1435 = vadd.f32 %v1433, %v1434
      %v1436 = vsel %vm1396, %v1384, 0.0
      %v1437 = vadd.f32 %v1435, %v1436
      %v1438 = vsel %vm1396, %v1385, 0.0
      %v1439 = vadd.f32 %v1437, %v1438
      %v1440 = vsel %vm1396, %v1386, 0.0
      %v1441 = vadd.f32 %v1439, %v1440
      %v1442 = vsel %vm1396, %v1387, 0.0
      %v1443 = vadd.f32 %v1441, %v1442
      %v1444 = vsel %vm1396, %v1388, 0.0
      %v1445 = vadd.f32 %v1443, %v1444
      %v1446 = vsel %vm1396, %v1389, 0.0
      %v1447 = vadd.f32 %v1445, %v1446
      %v1448 = vsel %vm1396, %v1390, 0.0
      %v1449 = vadd.f32 %v1447, %v1448
      %v1450 = vsel %vm1396, %v1391, 0.0
      %v1451 = vadd.f32 %v1449, %v1450
      %v1452 = vsel %vm1396, %v1392, 0.0
      %v1453 = vadd.f32 %v1451, %v1452
      %v1454 = vsel %vm1396, %v1393, 0.0
      %v1455 = vadd.f32 %v1453, %v1454
      %v1456 = vsel %vm1396, %v1394, 0.0
      %v1457 = vadd.f32 %v1455, %v1456
      %v1458 = vsel %vm1396, %v1395, 0.0
      %v1459 = vadd.f32 %v1457, %v1458
      %1460 = vadd.xlane.f32.xlu0 %v1459
      %v1461 = vpop.xlane.xlu0 %1460
      %v1462 = vrot.slane %v1461, 4
      %v1463 = vadd.f32 %v1461, %v1462
      %v1464 = vrot.slane %v1463, 2
      %v1465 = vadd.f32 %v1463, %v1464
      %v1466 = vrot.slane %v1465, 1
      %v1467 = vadd.f32 %v1465, %v1466
      %s1468 = vtos %v1467
      %v1469 = vstv %s1468
      %v1470 = vadd.f32 %v1363, %v1469
      %vm1471 = vcmask 0
      %1472 = vst.msk [vmem:[#allocation2] sm:$0x1] %vm1471, %v1470
      %v1473 = vld [vmem:[#allocation3] sm:$0x1]
      %v1474 = vmul.f32 %v1300, %v629
      %v1475 = vmul.f32 %v1302, %v630
      %v1476 = vmul.f32 %v1304, %v631
      %v1477 = vmul.f32 %v1306, %v632
      %v1478 = vmul.f32 %v1308, %v633
      %v1479 = vmul.f32 %v1310, %v634
      %v1480 = vmul.f32 %v1312, %v635
      %v1481 = vmul.f32 %v1314, %v636
      %v1482 = vmul.f32 %v1316, %v637
      %v1483 = vmul.f32 %v1318, %v638
      %v1484 = vmul.f32 %v1320, %v639
      %v1485 = vmul.f32 %v1322, %v640
      %v1486 = vmul.f32 %v1324, %v641
      %v1487 = vmul.f32 %v1326, %v642
      %v1488 = vmul.f32 %v1328, %v643
      %v1489 = vmul.f32 %v1330, %v644
      %v1490 = vmul.f32 %v1332, %v645
      %v1491 = vmul.f32 %v1334, %v646
      %v1492 = vmul.f32 %v1336, %v647
      %v1493 = vmul.f32 %v1338, %v648
      %v1494 = vmul.f32 %v1340, %v649
      %v1495 = vmul.f32 %v1342, %v650
      %v1496 = vmul.f32 %v1344, %v651
      %v1497 = vmul.f32 %v1346, %v652
      %v1498 = vmul.f32 %v1348, %v653
      %v1499 = vmul.f32 %v1350, %v654
      %v1500 = vmul.f32 %v1352, %v655
      %v1501 = vmul.f32 %v1354, %v656
      %v1502 = vmul.f32 %v1356, %v657
      %v1503 = vmul.f32 %v1358, %v658
      %v1504 = vmul.f32 %v1360, %v659
      %v1505 = vmul.f32 %v1362, %v660
      %v1506 = vsel %vm1396, %v1474, 0.0
      %v1507 = vsel %vm1396, %v1475, 0.0
      %v1508 = vadd.f32 %v1506, %v1507
      %v1509 = vsel %vm1396, %v1476, 0.0
      %v1510 = vadd.f32 %v1508, %v1509
      %v1511 = vsel %vm1396, %v1477, 0.0
      %v1512 = vadd.f32 %v1510, %v1511
      %v1513 = vsel %vm1396, %v1478, 0.0
      %v1514 = vadd.f32 %v1512, %v1513
      %v1515 = vsel %vm1396, %v1479, 0.0
      %v1516 = vadd.f32 %v1514, %v1515
      %v1517 = vsel %vm1396, %v1480, 0.0
      %v1518 = vadd.f32 %v1516, %v1517
      %v1519 = vsel %vm1396, %v1481, 0.0
      %v1520 = vadd.f32 %v1518, %v1519
      %v1521 = vsel %vm1396, %v1482, 0.0
      %v1522 = vadd.f32 %v1520, %v1521
      %v1523 = vsel %vm1396, %v1483, 0.0
      %v1524 = vadd.f32 %v1522, %v1523
      %v1525 = vsel %vm1396, %v1484, 0.0
      %v1526 = vadd.f32 %v1524, %v1525
      %v1527 = vsel %vm1396, %v1485, 0.0
      %v1528 = vadd.f32 %v1526, %v1527
      %v1529 = vsel %vm1396, %v1486, 0.0
      %v1530 = vadd.f32 %v1528, %v1529
      %v1531 = vsel %vm1396, %v1487, 0.0
      %v1532 = vadd.f32 %v1530, %v1531
      %v1533 = vsel %vm1396, %v1488, 0.0
      %v1534 = vadd.f32 %v1532, %v1533
      %v1535 = vsel %vm1396, %v1489, 0.0
      %v1536 = vadd.f32 %v1534, %v1535
      %v1537 = vsel %vm1396, %v1490, 0.0
      %v1538 = vadd.f32 %v1536, %v1537
      %v1539 = vsel %vm1396, %v1491, 0.0
      %v1540 = vadd.f32 %v1538, %v1539
      %v1541 = vsel %vm1396, %v1492, 0.0
      %v1542 = vadd.f32 %v1540, %v1541
      %v1543 = vsel %vm1396, %v1493, 0.0
      %v1544 = vadd.f32 %v1542, %v1543
      %v1545 = vsel %vm1396, %v1494, 0.0
      %v1546 = vadd.f32 %v1544, %v1545
      %v1547 = vsel %vm1396, %v1495, 0.0
      %v1548 = vadd.f32 %v1546, %v1547
      %v1549 = vsel %vm1396, %v1496, 0.0
      %v1550 = vadd.f32 %v1548, %v1549
      %v1551 = vsel %vm1396, %v1497, 0.0
      %v1552 = vadd.f32 %v1550, %v1551
      %v1553 = vsel %vm1396, %v1498, 0.0
      %v1554 = vadd.f32 %v1552, %v1553
      %v1555 = vsel %vm1396, %v1499, 0.0
      %v1556 = vadd.f32 %v1554, %v1555
      %v1557 = vsel %vm1396, %v1500, 0.0
      %v1558 = vadd.f32 %v1556, %v1557
      %v1559 = vsel %vm1396, %v1501, 0.0
      %v1560 = vadd.f32 %v1558, %v1559
      %v1561 = vsel %vm1396, %v1502, 0.0
      %v1562 = vadd.f32 %v1560, %v1561
      %v1563 = vsel %vm1396, %v1503, 0.0
      %v1564 = vadd.f32 %v1562, %v1563
      %v1565 = vsel %vm1396, %v1504, 0.0
      %v1566 = vadd.f32 %v1564, %v1565
      %v1567 = vsel %vm1396, %v1505, 0.0
      %v1568 = vadd.f32 %v1566, %v1567
      %1569 = vadd.xlane.f32.xlu0 %v1568
      %v1570 = vpop.xlane.xlu0 %1569
      %v1571 = vrot.slane %v1570, 4
      %v1572 = vadd.f32 %v1570, %v1571
      %v1573 = vrot.slane %v1572, 2
      %v1574 = vadd.f32 %v1572, %v1573
      %v1575 = vrot.slane %v1574, 1
      %v1576 = vadd.f32 %v1574, %v1575
      %s1577 = vtos %v1576
      %v1578 = vstv %s1577
      %v1579 = vadd.f32 %v1473, %v1578
      %1580 = vst.msk [vmem:[#allocation3] sm:$0x1] %vm1471, %v1579
      %v1581 = vld [vmem:[#allocation4] sm:$0x1]
      %v1582 = vsel %vm1396, %v597, 0.0
      %v1583 = vsel %vm1396, %v598, 0.0
      %v1584 = vadd.f32 %v1582, %v1583
      %v1585 = vsel %vm1396, %v599, 0.0
      %v1586 = vadd.f32 %v1584, %v1585
      %v1587 = vsel %vm1396, %v600, 0.0
      %v1588 = vadd.f32 %v1586, %v1587
      %v1589 = vsel %vm1396, %v601, 0.0
      %v1590 = vadd.f32 %v1588, %v1589
      %v1591 = vsel %vm1396, %v602, 0.0
      %v1592 = vadd.f32 %v1590, %v1591
      %v1593 = vsel %vm1396, %v603, 0.0
      %v1594 = vadd.f32 %v1592, %v1593
      %v1595 = vsel %vm1396, %v604, 0.0
      %v1596 = vadd.f32 %v1594, %v1595
      %v1597 = vsel %vm1396, %v605, 0.0
      %v1598 = vadd.f32 %v1596, %v1597
      %v1599 = vsel %vm1396, %v606, 0.0
      %v1600 = vadd.f32 %v1598, %v1599
      %v1601 = vsel %vm1396, %v607, 0.0
      %v1602 = vadd.f32 %v1600, %v1601
      %v1603 = vsel %vm1396, %v608, 0.0
      %v1604 = vadd.f32 %v1602, %v1603
      %v1605 = vsel %vm1396, %v609, 0.0
      %v1606 = vadd.f32 %v1604, %v1605
      %v1607 = vsel %vm1396, %v610, 0.0
      %v1608 = vadd.f32 %v1606, %v1607
      %v1609 = vsel %vm1396, %v611, 0.0
      %v1610 = vadd.f32 %v1608, %v1609
      %v1611 = vsel %vm1396, %v612, 0.0
      %v1612 = vadd.f32 %v1610, %v1611
      %v1613 = vsel %vm1396, %v613, 0.0
      %v1614 = vadd.f32 %v1612, %v1613
      %v1615 = vsel %vm1396, %v614, 0.0
      %v1616 = vadd.f32 %v1614, %v1615
      %v1617 = vsel %vm1396, %v615, 0.0
      %v1618 = vadd.f32 %v1616, %v1617
      %v1619 = vsel %vm1396, %v616, 0.0
      %v1620 = vadd.f32 %v1618, %v1619
      %v1621 = vsel %vm1396, %v617, 0.0
      %v1622 = vadd.f32 %v1620, %v1621
      %v1623 = vsel %vm1396, %v618, 0.0
      %v1624 = vadd.f32 %v1622, %v1623
      %v1625 = vsel %vm1396, %v619, 0.0
      %v1626 = vadd.f32 %v1624, %v1625
      %v1627 = vsel %vm1396, %v620, 0.0
      %v1628 = vadd.f32 %v1626, %v1627
      %v1629 = vsel %vm1396, %v621, 0.0
      %v1630 = vadd.f32 %v1628, %v1629
      %v1631 = vsel %vm1396, %v622, 0.0
      %v1632 = vadd.f32 %v1630, %v1631
      %v1633 = vsel %vm1396, %v623, 0.0
      %v1634 = vadd.f32 %v1632, %v1633
      %v1635 = vsel %vm1396, %v624, 0.0
      %v1636 = vadd.f32 %v1634, %v1635
      %v1637 = vsel %vm1396, %v625, 0.0
      %v1638 = vadd.f32 %v1636, %v1637
      %v1639 = vsel %vm1396, %v626, 0.0
      %v1640 = vadd.f32 %v1638, %v1639
      %v1641 = vsel %vm1396, %v627, 0.0
      %v1642 = vadd.f32 %v1640, %v1641
      %v1643 = vsel %vm1396, %v628, 0.0
      %v1644 = vadd.f32 %v1642, %v1643
      %1645 = vadd.xlane.f32.xlu0 %v1644
      %v1646 = vpop.xlane.xlu0 %1645
      %v1647 = vrot.slane %v1646, 4
      %v1648 = vadd.f32 %v1646, %v1647
      %v1649 = vrot.slane %v1648, 2
      %v1650 = vadd.f32 %v1648, %v1649
      %v1651 = vrot.slane %v1650, 1
      %v1652 = vadd.f32 %v1650, %v1651
      %s1653 = vtos %v1652
      %v1654 = vstv %s1653
      %v1655 = vadd.f32 %v1581, %v1654
      %1656 = vst.msk [vmem:[#allocation4] sm:$0x1] %vm1471, %v1655
      %v1657 = vld [vmem:[#allocation5] sm:$0x1]
      %v1658 = vsel %vm1396, %v629, 0.0
      %v1659 = vsel %vm1396, %v630, 0.0
      %v1660 = vadd.f32 %v1658, %v1659
      %v1661 = vsel %vm1396, %v631, 0.0
      %v1662 = vadd.f32 %v1660, %v1661
      %v1663 = vsel %vm1396, %v632, 0.0
      %v1664 = vadd.f32 %v1662, %v1663
      %v1665 = vsel %vm1396, %v633, 0.0
      %v1666 = vadd.f32 %v1664, %v1665
      %v1667 = vsel %vm1396, %v634, 0.0
      %v1668 = vadd.f32 %v1666, %v1667
      %v1669 = vsel %vm1396, %v635, 0.0
      %v1670 = vadd.f32 %v1668, %v1669
      %v1671 = vsel %vm1396, %v636, 0.0
      %v1672 = vadd.f32 %v1670, %v1671
      %v1673 = vsel %vm1396, %v637, 0.0
      %v1674 = vadd.f32 %v1672, %v1673
      %v1675 = vsel %vm1396, %v638, 0.0
      %v1676 = vadd.f32 %v1674, %v1675
      %v1677 = vsel %vm1396, %v639, 0.0
      %v1678 = vadd.f32 %v1676, %v1677
      %v1679 = vsel %vm1396, %v640, 0.0
      %v1680 = vadd.f32 %v1678, %v1679
      %v1681 = vsel %vm1396, %v641, 0.0
      %v1682 = vadd.f32 %v1680, %v1681
      %v1683 = vsel %vm1396, %v642, 0.0
      %v1684 = vadd.f32 %v1682, %v1683
      %v1685 = vsel %vm1396, %v643, 0.0
      %v1686 = vadd.f32 %v1684, %v1685
      %v1687 = vsel %vm1396, %v644, 0.0
      %v1688 = vadd.f32 %v1686, %v1687
      %v1689 = vsel %vm1396, %v645, 0.0
      %v1690 = vadd.f32 %v1688, %v1689
      %v1691 = vsel %vm1396, %v646, 0.0
      %v1692 = vadd.f32 %v1690, %v1691
      %v1693 = vsel %vm1396, %v647, 0.0
      %v1694 = vadd.f32 %v1692, %v1693
      %v1695 = vsel %vm1396, %v648, 0.0
      %v1696 = vadd.f32 %v1694, %v1695
      %v1697 = vsel %vm1396, %v649, 0.0
      %v1698 = vadd.f32 %v1696, %v1697
      %v1699 = vsel %vm1396, %v650, 0.0
      %v1700 = vadd.f32 %v1698, %v1699
      %v1701 = vsel %vm1396, %v651, 0.0
      %v1702 = vadd.f32 %v1700, %v1701
      %v1703 = vsel %vm1396, %v652, 0.0
      %v1704 = vadd.f32 %v1702, %v1703
      %v1705 = vsel %vm1396, %v653, 0.0
      %v1706 = vadd.f32 %v1704, %v1705
      %v1707 = vsel %vm1396, %v654, 0.0
      %v1708 = vadd.f32 %v1706, %v1707
      %v1709 = vsel %vm1396, %v655, 0.0
      %v1710 = vadd.f32 %v1708, %v1709
      %v1711 = vsel %vm1396, %v656, 0.0
      %v1712 = vadd.f32 %v1710, %v1711
      %v1713 = vsel %vm1396, %v657, 0.0
      %v1714 = vadd.f32 %v1712, %v1713
      %v1715 = vsel %vm1396, %v658, 0.0
      %v1716 = vadd.f32 %v1714, %v1715
      %v1717 = vsel %vm1396, %v659, 0.0
      %v1718 = vadd.f32 %v1716, %v1717
      %v1719 = vsel %vm1396, %v660, 0.0
      %v1720 = vadd.f32 %v1718, %v1719
      %1721 = vadd.xlane.f32.xlu0 %v1720
      %v1722 = vpop.xlane.xlu0 %1721
      %v1723 = vrot.slane %v1722, 4
      %v1724 = vadd.f32 %v1722, %v1723
      %v1725 = vrot.slane %v1724, 2
      %v1726 = vadd.f32 %v1724, %v1725
      %v1727 = vrot.slane %v1726, 1
      %v1728 = vadd.f32 %v1726, %v1727
      %s1729 = vtos %v1728
      %v1730 = vstv %s1729
      %v1731 = vadd.f32 %v1657, %v1730
      %1732 = vst.msk [vmem:[#allocation5] sm:$0x1] %vm1471, %v1731
      // Predicated region
      $region77: #{_lambda_.1} parent=71 // pred_check
        %p1733 = pneg %p553
      $region78: #{_lambda_.1} parent=71 // pred_check_branch
        %1735 = sbr.rel (%p1733) target = $region80
      $region79: #{_lambda_.1} parent=71 // pred_region
        %v1736 = vld [vmem:[#allocation2] sm:$0x1]
        %v1737 = vld [vmem:[#allocation3] sm:$0x1]
        %v1738 = vadd.f32 %v1736, %v1737
        %v1739 = vld [vmem:[#allocation4] sm:$0x1]
        %vm1740 = vcmp.gt.f32.partialorder %v1739, 0.0
        %v1741 = vld [vmem:[#allocation5] sm:$0x1]
        %vm1742 = vcmp.gt.f32.partialorder %v1741, 0.0
        %vm1743 = vmand %vm1740, %vm1742
        %v1744 = vadd.f32 %v1738, 1e-08
        %v1745 = vrcp.pop %v1744
        %v1746 = vmul.f32 %v1736, %v1745
        %v1747 = vlog2.pop %v1746
        %v1748 = vmul.f32 %v1747, 0.6931472
        %v1749 = vsub.f32 0.0, %v1748
        %v1750 = vsel %vm1743, %v1749, 0.0
        %v1751 = vsel %vm1743, 1, 0
        %v1752 = vcvt.s32.f32 %v1751
        %vm1753 = vcmp.eq.s32.totalorder %v555, 0
        %v1755 = vlaneseq
        %v1756 = vshrl.u32 %v1755, 7
        %v1757 = vsub.s32 0, %v1756
        %v1758 = vrot.slane %v1750, %v1757
        %1759 = vset.pattern.permute.xlu0 0
        %1760 = vperm.xlu0 %1759, %v1758
        %v1761 = vpop.permute.xlu0 %1760
        %v1763 = vsel %vm1753, %v1761, 0.0
        %vm1764 = vcmp.eq.s32.totalorder %v555, 1
        %v1766 = vlaneseq
        %v1767 = vshrl.u32 %v1766, 7
        %v1768 = vsub.s32 0, %v1767
        %v1769 = vrot.slane %v1752, %v1768
        %1770 = vset.pattern.permute.xlu0 0
        %1771 = vperm.xlu0 %1770, %v1769
        %v1772 = vpop.permute.xlu0 %1771
        %v1774 = vsel %vm1764, %v1772, %v1763
        %1775 = vst [vmem:[%s552] sm:$0xff] %v1774
      $region80: #{_lambda_.1} parent=71 // pred_fallthru
        _
      %p1776 = scmp.eq.s32.totalorder %s28, 0
      %p1777 = pnand %p553, %p1776
      %p1778 = pneg %p1777
      // Predicated region
      $region81: #{_lambda_.1} parent=71 // pred_check
        _
      $region82: #{_lambda_.1} parent=71 // pred_check_branch
        %1780 = sbr.rel (%p1777) target = $region84
      $region83: #{_lambda_.1} parent=71 // pred_region
        %v1781 = vld [vmem:[%s0] sm:$0xf]
        %v1782 = vld [vmem:[%s1] sm:$0xf]
        %v1783 = vsub.f32 %v1782, 0.5
        %v1784 = vmul.f32 %v1783, 2.0
        %v1785 = vmax.f32 %v1784, 0.0
        %v1786 = vmin.f32 %v1785, 1.0
        %v1787 = vld [vmem:[%s2] sm:$0xf]
        %v1788 = vmax.f32 %v1781, 0.0
        %v1789 = vmul.f32 %v1781, %v1786
        %v1790 = vsub.f32 %v1788, %v1789
        %v1791 = vand.u32 2147483647, %v1781
        %v1792 = vsub.f32 0.0, %v1791
        %v1793 = vmul.f32 %v1792, 1.442695
        %v1794 = vpow.pop %v1793
        %v1795 = vadd.f32 %v1794, 1.0
        %v1796 = vlog2.pop %v1795
        %v1797 = vmul.f32 %v1796, 0.6931472
        %v1798 = vadd.f32 %v1790, %v1797
        %v1799 = vmul.f32 %v1798, %v1787
        %v1802 = vunpack.c.l.s4 1983009808
        %v1803 = vunpack.c.0.s8 %v1802
        %v1804 = vlaneseq
        %v1805 = vshrl.u32 %v1804, 7
        %v1806 = vsub.s32 %v1803, %v1805
        %v1807 = vrot.slane %v1799, %v1806
        %v1808 = vcombine.high %v1807, %v1807
        %vm1811 = vcmask 1041408
        %v1812 = vsel %vm1811, %v1807, 0.0
        %v1813 = vsel %vm1811, %v1808, 0.0
        %v1814 = vadd.f32 %v1812, %v1813
        %1815 = vadd.xlane.f32.xlu0 %v1814
        %v1816 = vpop.xlane.xlu0 %1815
        %v1817 = vrot.slane %v1816, 4
        %v1818 = vadd.f32 %v1816, %v1817
        %v1819 = vrot.slane %v1818, 2
        %v1820 = vadd.f32 %v1818, %v1819
        %v1821 = vrot.slane %v1820, 1
        %v1822 = vadd.f32 %v1820, %v1821
        %s1823 = vtos %v1822
        %v1824 = vstv %s1823
        %v1827 = vunpack.c.l.s4 1983009808
        %v1828 = vunpack.c.0.s8 %v1827
        %v1829 = vlaneseq
        %v1830 = vshrl.u32 %v1829, 7
        %v1831 = vsub.s32 %v1828, %v1830
        %v1832 = vrot.slane %v1787, %v1831
        %v1833 = vcombine.high %v1832, %v1832
        %v1836 = vsel %vm1811, %v1832, 0.0
        %v1837 = vsel %vm1811, %v1833, 0.0
        %v1838 = vadd.f32 %v1836, %v1837
        %1839 = vadd.xlane.f32.xlu0 %v1838
        %v1840 = vpop.xlane.xlu0 %1839
        %v1841 = vrot.slane %v1840, 4
        %v1842 = vadd.f32 %v1840, %v1841
        %v1843 = vrot.slane %v1842, 2
        %v1844 = vadd.f32 %v1842, %v1843
        %v1845 = vrot.slane %v1844, 1
        %v1846 = vadd.f32 %v1844, %v1845
        %s1847 = vtos %v1846
        %v1848 = vstv %s1847
        %v1849 = vmax.f32 %v1848, 1.0
        %v1850 = vrcp.pop %v1849
        %v1851 = vmul.f32 %v1824, %v1850
        %v1852 = vld [vmem:[%s3] sm:$0x3]
        %v1853 = vld [vmem:[%s4] sm:$0x3]
        %v1854 = vld [vmem:[%s4 + $0x2] sm:$0x3]
        %vm1855 = vcmask 123904
        %v1856 = vsel %vm1855, %v1853, 0.0
        %v1857 = vrot.slane %v1856, 4
        %v1858 = vadd.f32 %v1856, %v1857
        %v1859 = vrot.slane %v1858, 2
        %v1860 = vadd.f32 %v1858, %v1859
        %v1861 = vrot.slane %v1860, 1
        %v1862 = vadd.f32 %v1860, %v1861
        %v1863 = vsel %vm1855, %v1854, 0.0
        %v1864 = vrot.slane %v1863, 4
        %v1865 = vadd.f32 %v1863, %v1864
        %v1866 = vrot.slane %v1865, 2
        %v1867 = vadd.f32 %v1865, %v1866
        %v1868 = vrot.slane %v1867, 1
        %v1869 = vadd.f32 %v1867, %v1868
        %v1870 = vsel %vm1855, %v1852, -inf
        %1871 = vmax.xlane.f32.xlu0 %v1870
        %v1872 = vpop.xlane.xlu0 %1871
        %v1873 = vsub.f32 %v1852, %v1872
        %v1874 = vmul.f32 %v1873, 1.442695
        %v1875 = vpow.pop %v1874
        %v1876 = vsel %vm1855, %v1875, 0.0
        %1877 = vadd.xlane.f32.xlu0 %v1876
        %v1878 = vpop.xlane.xlu0 %1877
        %v1879 = vlog2.pop %v1878
        %v1880 = vmul.f32 %v1879, 0.6931472
        %v1881 = vadd.f32 %v1872, %v1880
        %v1882 = vsub.f32 %v1852, %v1881
        %v1884 = vrot.slane %v1882, 1
        %v1887 = vmul.f32 %v1862, %v1882
        %v1888 = vmul.f32 %v1869, %v1884
        %v1891 = vrot.slane %v1888, 7
        %vm1892 = vcmask 1041409
        %v1893 = vsel %vm1892, %v1891, %v1887
        %v1895 = vsel %vm1855, %v1893, 0.0
        %1896 = vadd.xlane.f32.xlu0 %v1895
        %v1897 = vpop.xlane.xlu0 %1896
        %v1900 = vsel %vm1892, %v1869, %v1862
        %v1902 = vsel %vm1855, %v1900, 0.0
        %1903 = vadd.xlane.f32.xlu0 %v1902
        %v1904 = vpop.xlane.xlu0 %1903
        %v1905 = vsub.f32 0.0, %v1897
        %v1906 = vadd.f32 %v1904, 1e-08
        %v1907 = vrcp.pop %v1906
        %v1908 = vmul.f32 %v1905, %v1907
        %vm1909 = vcmask 1024
        %v1910 = vsel %vm1909, %v1908, 0.0
        %1911 = vadd.xlane.f32.xlu0 %v1910
        %v1912 = vpop.xlane.xlu0 %1911
        %v1913 = vrot.slane %v1912, 4
        %v1914 = vadd.f32 %v1912, %v1913
        %v1915 = vrot.slane %v1914, 2
        %v1916 = vadd.f32 %v1914, %v1915
        %v1917 = vrot.slane %v1916, 1
        %v1918 = vadd.f32 %v1916, %v1917
        %s1919 = vtos %v1918
        %v1920 = vstv %s1919
        %v1921 = vrcp.pop 2.0
        %v1922 = vmul.f32 %v1920, %v1921
        %v1923 = vld [vmem:[%s5] sm:$0x3]
        %v1924 = vld [vmem:[%s6] sm:$0x3]
        %v1925 = vsub.f32 %v1924, 0.5
        %v1926 = vmul.f32 %v1925, 2.0
        %v1927 = vmax.f32 %v1926, 0.0
        %v1928 = vmin.f32 %v1927, 1.0
        %v1929 = vmax.f32 %v1923, 0.0
        %v1930 = vmul.f32 %v1923, %v1928
        %v1931 = vsub.f32 %v1929, %v1930
        %v1932 = vand.u32 2147483647, %v1923
        %v1933 = vsub.f32 0.0, %v1932
        %v1934 = vmul.f32 %v1933, 1.442695
        %v1935 = vpow.pop %v1934
        %v1936 = vadd.f32 %v1935, 1.0
        %v1937 = vlog2.pop %v1936
        %v1938 = vmul.f32 %v1937, 0.6931472
        %v1939 = vadd.f32 %v1931, %v1938
        %vm1940 = vcmask 25600
        %v1941 = vsel %vm1940, %v1939, 0.0
        %1942 = vadd.xlane.f32.xlu0 %v1941
        %v1943 = vpop.xlane.xlu0 %1942
        %v1944 = vrot.slane %v1943, 4
        %v1945 = vadd.f32 %v1943, %v1944
        %v1946 = vrot.slane %v1945, 2
        %v1947 = vadd.f32 %v1945, %v1946
        %v1948 = vrot.slane %v1947, 1
        %v1949 = vadd.f32 %v1947, %v1948
        %s1950 = vtos %v1949
        %v1951 = vstv %s1950
        %v1952 = vrcp.pop 8.0
        %v1953 = vmul.f32 %v1951, %v1952
        %v1954 = vld [vmem:[%s7] sm:$0x3]
        %v1955 = vld [vmem:[%s8] sm:$0x3]
        %v1956 = vsub.f32 %v1954, %v1955
        %v1957 = vand.u32 2147483647, %v1956
        %vm1958 = vcmp.lt.f32.partialorder %v1957, 1.0
        %v1959 = vmul.f32 %v1956, 0.5
        %v1960 = vmul.f32 %v1959, %v1956
        %v1961 = vsub.f32 %v1957, 0.5
        %v1962 = vsel %vm1958, %v1960, %v1961
        %vm1963 = vcmask 58368
        %v1964 = vsel %vm1963, %v1962, 0.0
        %1965 = vadd.xlane.f32.xlu0 %v1964
        %v1966 = vpop.xlane.xlu0 %1965
        %v1967 = vrot.slane %v1966, 4
        %v1968 = vadd.f32 %v1966, %v1967
        %v1969 = vrot.slane %v1968, 2
        %v1970 = vadd.f32 %v1968, %v1969
        %v1971 = vrot.slane %v1970, 1
        %v1972 = vadd.f32 %v1970, %v1971
        %s1973 = vtos %v1972
        %v1974 = vstv %s1973
        %v1975 = vmul.f32 %v1974, %v1952
        %v1976 = vld [vmem:[%s552] sm:$0xff]
        %vm1977 = vcmp.eq.s32.totalorder %v555, 2
        %v1978 = vsel %vm1977, %v1851, %v1976
        %vm1979 = vcmp.eq.s32.totalorder %v555, 3
        %v1980 = vsel %vm1979, %v1922, %v1978
        %vm1981 = vcmp.eq.s32.totalorder %v555, 4
        %v1982 = vsel %vm1981, %v1953, %v1980
        %vm1983 = vcmp.eq.s32.totalorder %v555, 5
        %v1984 = vsel %vm1983, %v1975, %v1982
        %1985 = vst [vmem:[%s552] sm:$0xff] %v1984
      $region84: #{_lambda_.1} parent=71 // pred_fallthru
        _
      %p1986 = scmp.lt.s32.totalorder %s28, 1
      %s1987 = scalar_select %p1986, %s28, 1
      %s1988 = smul.addr %s1987, 8
      %s1989 = scalar_lea.vmem %s13, %s1988
      // Predicated region
      $region85: #{_lambda_.1} parent=71 // pred_check
        %p1990 = pneg %p353
      $region86: #{_lambda_.1} parent=71 // pred_check_branch
        %1992 = sbr.rel (%p1990) target = $region88
      $region87: #{_lambda_.1} parent=71 // pred_region
        _
      $region88: #{_lambda_.1} parent=71 // pred_fallthru
        _
    $region72: #{_lambda_.1} parent=5 // pred_fallthru
      _
    %p1993 = scmp.le.s32.totalorder 2, %s19
    // Predicated region
    $region89: #{_lambda_.1} parent=5 // pred_check
      %p1994 = pneg %p1993
    $region90: #{_lambda_.1} parent=5 // pred_check_branch
      %1996 = sbr.rel (%p1994) target = $region92
    $region91: #{_lambda_.1} parent=5 // pred_region
      %s1997 = ssub.s32 %s19, 2
      // Predicated region
      $region93: #{_lambda_.1} parent=91 // pred_check
        %p1998 = pneg %p359
      $region94: #{_lambda_.1} parent=91 // pred_check_branch
        %2000 = sbr.rel (%p1998) target = $region96
      $region95: #{_lambda_.1} parent=91 // pred_region
        %p2001 = scmp.lt.s32.totalorder %s30, 1
        %s2002 = scalar_select %p2001, %s30, 1
        %s2003 = smul.addr %s2002, 8
        %s2004 = scalar_lea.vmem %s13, %s2003
      $region96: #{_lambda_.1} parent=91 // pred_fallthru
        _
    $region92: #{_lambda_.1} parent=5 // pred_fallthru
      _
  $region6: #{_lambda_.1} parent=0 // loop_footer
    %s23 = sadd.s32 1, %s19
  $region7: #{_lambda_.1} parent=0 // loop_footer_branch
    %18 = sbr.rel target = $region3
  $region8: #{_lambda_.1} parent=0 // loop_exit
    _

</llo_original>
